<compile_context>
chip_gen: v7x
topology: tpu7x:2x2x1
jax: 0.10.0
libtpu: 0.0.40
codegen_flags: <defaults>
</compile_context>

<pallas_src>
import jax
import jax.numpy as jnp
from jax import lax
from jax.experimental import pallas as pl
from jax.experimental.pallas import tpu as pltpu

_VMEM = pl.BlockSpec(memory_space=pltpu.MemorySpace.VMEM)


def _lstm_activate(gates, c, H):
    """PyTorch-ordered LSTM gate activation (i, f, g, o) on pre-computed gate pre-activations."""
    i = jax.nn.sigmoid(gates[:, 0 * H:1 * H])
    f = jax.nn.sigmoid(gates[:, 1 * H:2 * H])
    g = jnp.tanh(gates[:, 2 * H:3 * H])
    o = jax.nn.sigmoid(gates[:, 3 * H:4 * H])
    c_new = f * c + i * g
    h_new = o * jnp.tanh(c_new)
    return h_new, c_new


# --------------------------------------------------------------------------- encoder kernel


def encoder_kernel(
    emb2_ref,                              # (S*B, E)  embedded source, time-major rows
    wih_f_ref, whh_f_ref, b_f_ref,         # forward LSTM:  (E,4H), (H,4H), (1,4H)
    wih_b_ref, whh_b_ref, b_b_ref,         # backward LSTM
    fch_wf_ref, fch_wb_ref, fch_b_ref,     # fc_hidden split: (H,H), (H,H), (1,H)
    fcc_wf_ref, fcc_wb_ref, fcc_b_ref,     # fc_cell   split
    states_f_ref, states_b_ref,            # out: (S,B,H) each
    hidden_ref, cell_ref,                  # out: (B,H) each
    xg_f_ref, xg_b_ref,                    # scratch: (S*B, 4H) hoisted input projections
):
    S, B, H = states_f_ref.shape

    # Hoist the input projections (and bias) out of the recurrence: one batched MXU matmul
    # per direction instead of 2*S tiny matmuls on the latency-critical chain.
    emb2 = emb2_ref[...]
    xg_f_ref[...] = (
        jnp.dot(emb2, wih_f_ref[...], preferred_element_type=jnp.float32) + b_f_ref[...]
    )
    xg_b_ref[...] = (
        jnp.dot(emb2, wih_b_ref[...], preferred_element_type=jnp.float32) + b_b_ref[...]
    )

    whh_f = whh_f_ref[...]
    whh_b = whh_b_ref[...]

    h0 = jnp.zeros((B, H), jnp.float32)
    c0 = jnp.zeros((B, H), jnp.float32)

    # Interleave the two independent directions in one loop so each chain's MXU/EUP latency
    # hides under the other's work.
    def body(i, carry):
        hf, cf, hb, cb = carry
        rb = S - 1 - i
        row_f = pl.multiple_of(i * B, B)
        row_b = pl.multiple_of(rb * B, B)
        gf = xg_f_ref[pl.ds(row_f, B), :] + jnp.dot(
            hf, whh_f, preferred_element_type=jnp.float32)
        gb = xg_b_ref[pl.ds(row_b, B), :] + jnp.dot(
            hb, whh_b, preferred_element_type=jnp.float32)
        hf, cf = _lstm_activate(gf, cf, H)
        hb, cb = _lstm_activate(gb, cb, H)
        states_f_ref[i] = hf
        states_b_ref[rb] = hb
        return hf, cf, hb, cb

    hf, cf, hb, cb = lax.fori_loop(0, S, body, (h0, c0, h0, c0))

    # fc_hidden(cat(h_f, h_b)) / fc_cell(cat(c_f, c_b)) with the concat folded into split weights.
    hidden_ref[...] = (
        jnp.dot(hf, fch_wf_ref[...], preferred_element_type=jnp.float32)
        + jnp.dot(hb, fch_wb_ref[...], preferred_element_type=jnp.float32)
        + fch_b_ref[...]
    )
    cell_ref[...] = (
        jnp.dot(cf, fcc_wf_ref[...], preferred_element_type=jnp.float32)
        + jnp.dot(cb, fcc_wb_ref[...], preferred_element_type=jnp.float32)
        + fcc_b_ref[...]
    )


# --------------------------------------------------------------------------- fused decoder


def decoder_kernel(
    forced_ref,                            # (T, B, 1) int32: [0]=start token; t>=1: target[t] if TF else -1
    states_f_ref, states_b_ref,            # (S, B, H) encoder states (fwd / bwd halves, never concatenated)
    e_sb_ref, e_bs_ref,                    # (S, B) / (B, S): hoisted encoder part of the energy linear
    h0_ref, c0_ref,                        # (B, H) decoder initial hidden / cell (from fc_hidden/fc_cell)
    we_h_ref,                              # (1, H)  energy-linear weights for the hidden part
    dec_emb_ref,                           # (V, E)  decoder embedding table (resident in VMEM)
    wih_emb_ref,                           # (E, 4H) decoder LSTM input weights for the embedding slice
    wih_ctx_f_ref, wih_ctx_b_ref,          # (H, 4H) each: context slice, split fwd/bwd
    whh_ref, b_ref,                        # (H, 4H), (1, 4H)
    energy_ref,                            # out: (T-1, B, S) post-ReLU energies, lane-dense per step
    pred_ref,                              # out: (T-1, B, 1) int32 argmax over source positions
):
    T = forced_ref.shape[0]
    S, B, H = states_f_ref.shape
    V = dec_emb_ref.shape[0]
    G = whh_ref.shape[1]                   # 4H

    states_f = states_f_ref[...]
    states_b = states_b_ref[...]
    e_sb = e_sb_ref[...]
    e_bs = e_bs_ref[...]
    we_h = we_h_ref[...]
    whh = whh_ref[...]
    wih_cf = wih_ctx_f_ref[...]
    wih_cb = wih_ctx_b_ref[...]

    # Loop-invariant work hoisted out of the decode loop.
    emb_gate_table = jnp.dot(dec_emb_ref[...], wih_emb_ref[...],
                             preferred_element_type=jnp.float32)             # (V, 4H)
    b_dec = jnp.broadcast_to(b_ref[...], (B, G))                             # (B, 4H)
    viota = lax.broadcasted_iota(jnp.int32, (B, V), 1)                       # (B, V)
    col_bs = lax.broadcasted_iota(jnp.int32, (B, S), 1).astype(jnp.float32)  # (B, S)
    big = jnp.float32(S)

    x0 = forced_ref[0]                                                       # (B, 1) int32
    h0 = h0_ref[...]
    c0 = c0_ref[...]

    def step(j, carry):
        x_tok, h, c = carry

        # Embedding-gate row of the current token via one-hot matmul against the precomputed
        # table (replaces a per-step embedding gather + matmul).
        onehot = (x_tok == viota).astype(jnp.float32)                        # (B, V)
        emb_gates = jnp.dot(onehot, emb_gate_table,
                            preferred_element_type=jnp.float32)              # (B, 4H)

        # Attention energy = relu(W_e [h; enc] + b_e).  The encoder contribution is hoisted
        # (e_sb / e_bs); only the hidden contribution changes per step.
        h_term_col = lax.dot_general(h, we_h, (((1,), (1,)), ((), ())),
                                     preferred_element_type=jnp.float32)     # (B, 1)
        h_term_row = lax.dot_general(we_h, h, (((1,), (1,)), ((), ())),
                                     preferred_element_type=jnp.float32)     # (1, B)

        energy_bs = jnp.maximum(e_bs + h_term_col, 0.0)                      # (B, S) lane-dense
        energy_ref[j] = energy_bs

        # Softmax over source positions (dim 0) in (S, B) form for the context reduction.
        energy_sb = jnp.maximum(e_sb + h_term_row, 0.0)                      # (S, B)
        m_sb = jnp.max(energy_sb, axis=0, keepdims=True)
        p = jnp.exp(energy_sb - m_sb)
        attn_sb = p / jnp.sum(p, axis=0, keepdims=True)                      # (S, B)

        # argmax over source positions (first max, matching torch/jnp argmax).  Softmax is
        # monotonic, so argmax(attention) == argmax(energy).
        m_bs = jnp.max(energy_bs, axis=-1, keepdims=True)                    # (B, 1)
        best = jnp.min(jnp.where(energy_bs >= m_bs, col_bs, big),
                       axis=-1, keepdims=True).astype(jnp.int32)             # (B, 1)
        pred_ref[j] = best

        # context[b, :] = sum_s attn[s, b] * encoder_states[s, b, :]  (split fwd/bwd halves)
        ctx_f = jnp.sum(attn_sb[:, :, None] * states_f, axis=0)              # (B, H)
        ctx_b = jnp.sum(attn_sb[:, :, None] * states_b, axis=0)              # (B, H)

        # Decoder LSTM cell; input = cat(context, embedding) folded into split matmuls.
        gates = (
            jnp.dot(ctx_f, wih_cf, preferred_element_type=jnp.float32)
            + jnp.dot(ctx_b, wih_cb, preferred_element_type=jnp.float32)
            + jnp.dot(h, whh, preferred_element_type=jnp.float32)
            + emb_gates
            + b_dec
        )
        h_new, c_new = _lstm_activate(gates, c, H)

        # Next input token: teacher-forced target (>= 0 sentinel) or the model's best guess.
        forced_next = forced_ref[j + 1]                                      # (B, 1)
        x_next = jnp.where(forced_next >= 0, forced_next, best)
        return x_next, h_new, c_new

    _ = lax.fori_loop(0, T - 1, step, (x0, h0, c0))


# --------------------------------------------------------------------------- wrappers


def run_encoder(emb2, S, B, p):
    H = p["enc_whh_f"].shape[0]
    G = 4 * H
    E = emb2.shape[1]
    flops = 2 * (2 * S * B * E * G) + 2 * (2 * S * B * H * G) + 2 * (4 * B * H * H)
    trans = 2 * S * (5 * B * H)
    bytes_accessed = 4 * (S * B * E + 2 * (E * G + H * G + G) + 4 * H * H + 2 * H
                          + 2 * S * B * H + 2 * B * H)
    return pl.pallas_call(
        encoder_kernel,
        out_shape=(
            jax.ShapeDtypeStruct((S, B, H), jnp.float32),
            jax.ShapeDtypeStruct((S, B, H), jnp.float32),
            jax.ShapeDtypeStruct((B, H), jnp.float32),
            jax.ShapeDtypeStruct((B, H), jnp.float32),
        ),
        in_specs=[_VMEM] * 13,
        out_specs=(_VMEM,) * 4,
        scratch_shapes=[
            pltpu.VMEM((S * B, G), jnp.float32),
            pltpu.VMEM((S * B, G), jnp.float32),
        ],
        cost_estimate=pl.CostEstimate(flops=int(flops), transcendentals=int(trans),
                                      bytes_accessed=int(bytes_accessed)),
    )(
        emb2,
        p["enc_wih_f"], p["enc_whh_f"], p["enc_b_f"],
        p["enc_wih_b"], p["enc_whh_b"], p["enc_b_b"],
        p["fch_wf"], p["fch_wb"], p["fch_b"],
        p["fcc_wf"], p["fcc_wb"], p["fcc_b"],
    )


def run_decoder(forced, states_f, states_b, e_sb, e_bs, hidden, cell, p):
    T = forced.shape[0]
    S, B, H = states_f.shape
    G = 4 * H
    V, E = p["dec_emb"].shape
    steps = T - 1
    flops = 2 * V * E * G + steps * (2 * B * V * G + 3 * (2 * B * H * G) + 4 * S * B * H + 4 * B * H)
    trans = steps * (S * B + 5 * B * H)
    bytes_accessed = 4 * (T * B + 2 * S * B * H + S * B + B * S + 2 * B * H
                          + V * E + E * G + 3 * H * G + G + H
                          + steps * (B * S + B))
    return pl.pallas_call(
        decoder_kernel,
        out_shape=(
            jax.ShapeDtypeStruct((T - 1, B, S), jnp.float32),   # energies, lane-dense (B, S)
            jax.ShapeDtypeStruct((T - 1, B, 1), jnp.int32),     # argmax predictions
        ),
        in_specs=[_VMEM] * 14,
        out_specs=(_VMEM, _VMEM),
        cost_estimate=pl.CostEstimate(flops=int(flops), transcendentals=int(trans),
                                      bytes_accessed=int(bytes_accessed)),
    )(
        forced, states_f, states_b, e_sb, e_bs, hidden, cell,
        p["we_h"], p["dec_emb"], p["dec_wih_emb"],
        p["dec_wih_ctx_f"], p["dec_wih_ctx_b"], p["dec_whh"], p["dec_b"],
    )


# --------------------------------------------------------------------------- model


def init_params(key, vocab, emb, hidden):
    ks = jax.random.split(key, 24)

    def w(k, shape):
        return jax.random.normal(k, shape, jnp.float32) * 0.1

    H, E, V = hidden, emb, vocab
    return {
        "enc_emb": w(ks[0], (V, E)),
        "dec_emb": w(ks[1], (V, E)),
        # encoder bidirectional LSTM (PyTorch gate order i,f,g,o; b = b_ih + b_hh)
        "enc_wih_f": w(ks[2], (E, 4 * H)),
        "enc_whh_f": w(ks[3], (H, 4 * H)),
        "enc_b_f": w(ks[4], (1, 4 * H)),
        "enc_wih_b": w(ks[5], (E, 4 * H)),
        "enc_whh_b": w(ks[6], (H, 4 * H)),
        "enc_b_b": w(ks[7], (1, 4 * H)),
        # fc_hidden / fc_cell : Linear(2H -> H), weight split into fwd/bwd halves
        "fch_wf": w(ks[8], (H, H)),
        "fch_wb": w(ks[9], (H, H)),
        "fch_b": w(ks[10], (1, H)),
        "fcc_wf": w(ks[11], (H, H)),
        "fcc_wb": w(ks[12], (H, H)),
        "fcc_b": w(ks[13], (1, H)),
        # attention energy: Linear(3H -> 1), weight split hidden / enc-fwd / enc-bwd parts
        "we_h": w(ks[14], (1, H)),
        "we_f": w(ks[15], (1, H)),
        "we_b": w(ks[16], (1, H)),
        "be": w(ks[17], (1, 1)),
        # decoder LSTM: input = cat(context_fwd(H), context_bwd(H), embedding(E))
        "dec_wih_ctx_f": w(ks[18], (H, 4 * H)),
        "dec_wih_ctx_b": w(ks[19], (H, 4 * H)),
        "dec_wih_emb": w(ks[20], (E, 4 * H)),
        "dec_whh": w(ks[21], (H, 4 * H)),
        "dec_b": w(ks[22], (1, 4 * H)),
    }


def seq2seq_forward(params, source, target, tf_key, teacher_force_ratio=0.5):
    """source: (src_len, batch) int32 ; target: (target_len, batch) int32.
    Returns (outputs, predictions[1:]) matching the PyTorch module."""
    S, B = source.shape
    T = target.shape[0]                      # target_len ; src_len == target_len - 1

    # Pad the batch (sublane) dim to a multiple of 8; padded columns are independent
    # (no cross-batch interaction anywhere) and are sliced away at the end.
    B_pad = max(8, ((B + 7) // 8) * 8)
    pad = B_pad - B
    source_p = jnp.pad(source, ((0, 0), (0, pad)))
    target_p = jnp.pad(target, ((0, 0), (0, pad)))

    # --- encoder (embedding gather in plain JAX, the rest in one kernel) ---
    emb_src = jnp.take(params["enc_emb"], source_p, axis=0)          # (S, B_pad, E)
    emb2 = emb_src.reshape(S * B_pad, emb_src.shape[-1])
    states_f, states_b, hidden, cell = run_encoder(emb2, S, B_pad, params)

    # Hoisted encoder contribution to the attention energy (loop-invariant across decode
    # steps), supplied in both (S,B) and (B,S) orientations for the fused decoder.
    e_sb = (
        jnp.einsum("sbh,h->sb", states_f, params["we_f"][0])
        + jnp.einsum("sbh,h->sb", states_b, params["we_b"][0])
        + params["be"][0, 0]
    )                                                                # (S, B_pad)
    e_bs = e_sb.T                                                    # (B_pad, S)

    # Teacher forcing: one uniform per step (stands in for python random.random()).
    # forced[t] = target[t] where teacher forcing applies, else -1 (use model prediction);
    # forced[0] is always the start token target[0].
    tf_draws = jax.random.uniform(tf_key, (T,))
    use_tf = tf_draws < teacher_force_ratio
    forced = jnp.where(use_tf[:, None], target_p, -1)
    forced = forced.at[0].set(target_p[0])
    forced = forced.astype(jnp.int32)[:, :, None]                    # (T, B_pad, 1)

    # --- fused decode loop: one kernel for all T-1 steps ---
    energy_out, pred_out = run_decoder(
        forced, states_f, states_b, e_sb, e_bs, hidden, cell, params)

    outputs = jnp.zeros((T, B, T - 1), jnp.float32)
    outputs = outputs.at[1:].set(energy_out[:, :B, :])               # already (B, S) per step
    predictions = pred_out[:, :B, 0].astype(jnp.float32)             # (T-1, B)
    return outputs, predictions


# --------------------------------------------------------------------------- main

if __name__ == "__main__":
    SRC_LEN = 8            # source sequence length
    TGT_LEN = SRC_LEN + 1  # target includes a start token
    BATCH = 2
    VOCAB = 32
    EMB = 16
    HIDDEN = 32

    root = jax.random.PRNGKey(0)
    k_param, k_src, k_tgt, k_tf = jax.random.split(root, 4)

    params = init_params(k_param, VOCAB, EMB, HIDDEN)

    source = jax.random.randint(k_src, (SRC_LEN, BATCH), 0, VOCAB, dtype=jnp.int32)
    target = jax.random.randint(k_tgt, (TGT_LEN, BATCH), 0, SRC_LEN, dtype=jnp.int32)

    fwd = jax.jit(seq2seq_forward)
    outputs, predictions = fwd(params, source, target, k_tf)
    jax.block_until_ready((outputs, predictions))

    assert outputs.shape == (TGT_LEN, BATCH, TGT_LEN - 1), outputs.shape
    assert predictions.shape == (TGT_LEN - 1, BATCH), predictions.shape
    assert outputs.dtype == jnp.float32 and predictions.dtype == jnp.float32
    assert bool(jnp.all(jnp.isfinite(outputs))) and bool(jnp.all(jnp.isfinite(predictions)))
    assert bool(jnp.all(predictions >= 0)) and bool(jnp.all(predictions < SRC_LEN))

    print("KERNEL_OK")
</pallas_src>

<mosaic_0001>
module attributes {stable_mosaic.version = 11 : i64} {
  func.func @encoder_kernel(%arg0: memref<64x16xf32, #tpu.memory_space<vmem>>, %arg1: memref<16x128xf32, #tpu.memory_space<vmem>>, %arg2: memref<32x128xf32, #tpu.memory_space<vmem>>, %arg3: memref<1x128xf32, #tpu.memory_space<vmem>>, %arg4: memref<16x128xf32, #tpu.memory_space<vmem>>, %arg5: memref<32x128xf32, #tpu.memory_space<vmem>>, %arg6: memref<1x128xf32, #tpu.memory_space<vmem>>, %arg7: memref<32x32xf32, #tpu.memory_space<vmem>>, %arg8: memref<32x32xf32, #tpu.memory_space<vmem>>, %arg9: memref<1x32xf32, #tpu.memory_space<vmem>>, %arg10: memref<32x32xf32, #tpu.memory_space<vmem>>, %arg11: memref<32x32xf32, #tpu.memory_space<vmem>>, %arg12: memref<1x32xf32, #tpu.memory_space<vmem>>, %arg13: memref<8x8x32xf32, #tpu.memory_space<vmem>>, %arg14: memref<8x8x32xf32, #tpu.memory_space<vmem>>, %arg15: memref<8x32xf32, #tpu.memory_space<vmem>>, %arg16: memref<8x32xf32, #tpu.memory_space<vmem>>, %arg17: memref<64x128xf32, #tpu.memory_space<vmem>>, %arg18: memref<64x128xf32, #tpu.memory_space<vmem>>) attributes {dimension_semantics = [], scalar_prefetch = 0 : i64, scratch_operands = 2 : i64, tpu.core_type = #tpu.core_type<tc>} {
    %c0 = arith.constant 0 : index
    %c0_0 = arith.constant 0 : index
    %0 = vector.load %arg0[%c0, %c0_0] : memref<64x16xf32, #tpu.memory_space<vmem>>, vector<64x16xf32>
    %c0_1 = arith.constant 0 : index
    %c0_2 = arith.constant 0 : index
    %1 = vector.load %arg1[%c0_1, %c0_2] : memref<16x128xf32, #tpu.memory_space<vmem>>, vector<16x128xf32>
    %cst = arith.constant dense<0.000000e+00> : vector<64x128xf32>
    %2 = tpu.matmul %0, %1, %cst {dimension_numbers = #tpu.dot_dimension_numbers<[1], [0], [0], [1], [0, 0, 1, 1], [], []>} : vector<64x16xf32>, vector<16x128xf32>, vector<64x128xf32> -> vector<64x128xf32>
    %c0_3 = arith.constant 0 : index
    %c0_4 = arith.constant 0 : index
    %3 = vector.load %arg3[%c0_3, %c0_4] : memref<1x128xf32, #tpu.memory_space<vmem>>, vector<1x128xf32>
    %4 = vector.broadcast %3 : vector<1x128xf32> to vector<64x128xf32>
    %5 = arith.addf %2, %4 : vector<64x128xf32>
    %c0_5 = arith.constant 0 : index
    %c0_6 = arith.constant 0 : index
    %6 = vector.load %arg17[%c0_5, %c0_6] : memref<64x128xf32, #tpu.memory_space<vmem>>, vector<64x128xf32>
    tpu.vector_store %arg17[%c0_5, %c0_6], %5 {strides = array<i32>} : memref<64x128xf32, #tpu.memory_space<vmem>>, vector<64x128xf32>,
    %c0_7 = arith.constant 0 : index
    %c0_8 = arith.constant 0 : index
    %7 = vector.load %arg4[%c0_7, %c0_8] : memref<16x128xf32, #tpu.memory_space<vmem>>, vector<16x128xf32>
    %cst_9 = arith.constant dense<0.000000e+00> : vector<64x128xf32>
    %8 = tpu.matmul %0, %7, %cst_9 {dimension_numbers = #tpu.dot_dimension_numbers<[1], [0], [0], [1], [0, 0, 1, 1], [], []>} : vector<64x16xf32>, vector<16x128xf32>, vector<64x128xf32> -> vector<64x128xf32>
    %c0_10 = arith.constant 0 : index
    %c0_11 = arith.constant 0 : index
    %9 = vector.load %arg6[%c0_10, %c0_11] : memref<1x128xf32, #tpu.memory_space<vmem>>, vector<1x128xf32>
    %10 = vector.broadcast %9 : vector<1x128xf32> to vector<64x128xf32>
    %11 = arith.addf %8, %10 : vector<64x128xf32>
    %c0_12 = arith.constant 0 : index
    %c0_13 = arith.constant 0 : index
    %12 = vector.load %arg18[%c0_12, %c0_13] : memref<64x128xf32, #tpu.memory_space<vmem>>, vector<64x128xf32>
    tpu.vector_store %arg18[%c0_12, %c0_13], %11 {strides = array<i32>} : memref<64x128xf32, #tpu.memory_space<vmem>>, vector<64x128xf32>,
    %c0_14 = arith.constant 0 : index
    %c0_15 = arith.constant 0 : index
    %13 = vector.load %arg2[%c0_14, %c0_15] : memref<32x128xf32, #tpu.memory_space<vmem>>, vector<32x128xf32>
    %c0_16 = arith.constant 0 : index
    %c0_17 = arith.constant 0 : index
    %14 = vector.load %arg5[%c0_16, %c0_17] : memref<32x128xf32, #tpu.memory_space<vmem>>, vector<32x128xf32>
    %cst_18 = arith.constant 0.000000e+00 : f32
    %15 = vector.broadcast %cst_18 : f32 to vector<8x32xf32>
    %cst_19 = arith.constant 0.000000e+00 : f32
    %16 = vector.broadcast %cst_19 : f32 to vector<8x32xf32>
    %c0_i32 = arith.constant 0 : i32
    %c8_i32 = arith.constant 8 : i32
    %17 = arith.addi %c0_i32, %c8_i32 : i32
    %c1_i32 = arith.constant 1 : i32
    %18:4 = scf.for %arg19 = %c0_i32 to %17 step %c1_i32 iter_args(%arg20 = %15, %arg21 = %16, %arg22 = %15, %arg23 = %16) -> (vector<8x32xf32>, vector<8x32xf32>, vector<8x32xf32>, vector<8x32xf32>)  : i32 {
      %c7_i32 = arith.constant 7 : i32
      %37 = arith.subi %c7_i32, %arg19 : i32
      %c8_i32_41 = arith.constant 8 : i32
      %38 = arith.muli %arg19, %c8_i32_41 : i32
      %39 = tpu.assume_multiple %38, 8 : i32
      %c8_i32_42 = arith.constant 8 : i32
      %40 = arith.muli %37, %c8_i32_42 : i32
      %41 = tpu.assume_multiple %40, 8 : i32
      %42 = arith.index_cast %39 : i32 to index
      %c0_43 = arith.constant 0 : index
      %43 = vector.load %arg17[%42, %c0_43] : memref<64x128xf32, #tpu.memory_space<vmem>>, vector<8x128xf32>
      %cst_44 = arith.constant dense<0.000000e+00> : vector<8x128xf32>
      %44 = tpu.matmul %arg20, %13, %cst_44 {dimension_numbers = #tpu.dot_dimension_numbers<[1], [0], [0], [1], [0, 0, 1, 1], [], []>} : vector<8x32xf32>, vector<32x128xf32>, vector<8x128xf32> -> vector<8x128xf32>
      %45 = arith.addf %43, %44 : vector<8x128xf32>
      %46 = arith.index_cast %41 : i32 to index
      %c0_45 = arith.constant 0 : index
      %47 = vector.load %arg18[%46, %c0_45] : memref<64x128xf32, #tpu.memory_space<vmem>>, vector<8x128xf32>
      %cst_46 = arith.constant dense<0.000000e+00> : vector<8x128xf32>
      %48 = tpu.matmul %arg22, %14, %cst_46 {dimension_numbers = #tpu.dot_dimension_numbers<[1], [0], [0], [1], [0, 0, 1, 1], [], []>} : vector<8x32xf32>, vector<32x128xf32>, vector<8x128xf32> -> vector<8x128xf32>
      %49 = arith.addf %47, %48 : vector<8x128xf32>
      %50 = vector.extract_strided_slice %45 {offsets = [0, 0], sizes = [8, 32], strides = [1, 1]} : vector<8x128xf32> to vector<8x32xf32>
      %51 = arith.negf %50 : vector<8x32xf32>
      %52 = math.exp %51 : vector<8x32xf32>
      %cst_47 = arith.constant 1.000000e+00 : f32
      %53 = vector.broadcast %cst_47 : f32 to vector<8x32xf32>
      %54 = arith.addf %53, %52 : vector<8x32xf32>
      %55 = arith.divf %53, %54 : vector<8x32xf32>
      %56 = vector.extract_strided_slice %45 {offsets = [0, 32], sizes = [8, 32], strides = [1, 1]} : vector<8x128xf32> to vector<8x32xf32>
      %57 = arith.negf %56 : vector<8x32xf32>
      %58 = math.exp %57 : vector<8x32xf32>
      %cst_48 = arith.constant 1.000000e+00 : f32
      %59 = vector.broadcast %cst_48 : f32 to vector<8x32xf32>
      %60 = arith.addf %59, %58 : vector<8x32xf32>
      %61 = arith.divf %59, %60 : vector<8x32xf32>
      %62 = vector.extract_strided_slice %45 {offsets = [0, 64], sizes = [8, 32], strides = [1, 1]} : vector<8x128xf32> to vector<8x32xf32>
      %63 = math.tanh %62 : vector<8x32xf32>
      %64 = vector.extract_strided_slice %45 {offsets = [0, 96], sizes = [8, 32], strides = [1, 1]} : vector<8x128xf32> to vector<8x32xf32>
      %65 = arith.negf %64 : vector<8x32xf32>
      %66 = math.exp %65 : vector<8x32xf32>
      %cst_49 = arith.constant 1.000000e+00 : f32
      %67 = vector.broadcast %cst_49 : f32 to vector<8x32xf32>
      %68 = arith.addf %67, %66 : vector<8x32xf32>
      %69 = arith.divf %67, %68 : vector<8x32xf32>
      %70 = arith.mulf %61, %arg21 : vector<8x32xf32>
      %71 = arith.mulf %55, %63 : vector<8x32xf32>
      %72 = arith.addf %70, %71 : vector<8x32xf32>
      %73 = math.tanh %72 : vector<8x32xf32>
      %74 = arith.mulf %69, %73 : vector<8x32xf32>
      %75 = vector.extract_strided_slice %49 {offsets = [0, 0], sizes = [8, 32], strides = [1, 1]} : vector<8x128xf32> to vector<8x32xf32>
      %76 = arith.negf %75 : vector<8x32xf32>
      %77 = math.exp %76 : vector<8x32xf32>
      %cst_50 = arith.constant 1.000000e+00 : f32
      %78 = vector.broadcast %cst_50 : f32 to vector<8x32xf32>
      %79 = arith.addf %78, %77 : vector<8x32xf32>
      %80 = arith.divf %78, %79 : vector<8x32xf32>
      %81 = vector.extract_strided_slice %49 {offsets = [0, 32], sizes = [8, 32], strides = [1, 1]} : vector<8x128xf32> to vector<8x32xf32>
      %82 = arith.negf %81 : vector<8x32xf32>
      %83 = math.exp %82 : vector<8x32xf32>
      %cst_51 = arith.constant 1.000000e+00 : f32
      %84 = vector.broadcast %cst_51 : f32 to vector<8x32xf32>
      %85 = arith.addf %84, %83 : vector<8x32xf32>
      %86 = arith.divf %84, %85 : vector<8x32xf32>
      %87 = vector.extract_strided_slice %49 {offsets = [0, 64], sizes = [8, 32], strides = [1, 1]} : vector<8x128xf32> to vector<8x32xf32>
      %88 = math.tanh %87 : vector<8x32xf32>
      %89 = vector.extract_strided_slice %49 {offsets = [0, 96], sizes = [8, 32], strides = [1, 1]} : vector<8x128xf32> to vector<8x32xf32>
      %90 = arith.negf %89 : vector<8x32xf32>
      %91 = math.exp %90 : vector<8x32xf32>
      %cst_52 = arith.constant 1.000000e+00 : f32
      %92 = vector.broadcast %cst_52 : f32 to vector<8x32xf32>
      %93 = arith.addf %92, %91 : vector<8x32xf32>
      %94 = arith.divf %92, %93 : vector<8x32xf32>
      %95 = arith.mulf %86, %arg23 : vector<8x32xf32>
      %96 = arith.mulf %80, %88 : vector<8x32xf32>
      %97 = arith.addf %95, %96 : vector<8x32xf32>
      %98 = math.tanh %97 : vector<8x32xf32>
      %99 = arith.mulf %94, %98 : vector<8x32xf32>
      %100 = arith.index_cast %arg19 : i32 to index
      %c0_53 = arith.constant 0 : index
      %c0_54 = arith.constant 0 : index
      %101 = vector.load %arg13[%100, %c0_53, %c0_54] : memref<8x8x32xf32, #tpu.memory_space<vmem>>, vector<1x8x32xf32>
      %102 = vector.shape_cast %101 : vector<1x8x32xf32> to vector<8x32xf32>
      %103 = vector.shape_cast %74 : vector<8x32xf32> to vector<1x8x32xf32>
      tpu.vector_store %arg13[%100, %c0_53, %c0_54], %103 {strides = array<i32>} : memref<8x8x32xf32, #tpu.memory_space<vmem>>, vector<1x8x32xf32>,
      %104 = arith.index_cast %37 : i32 to index
      %c0_55 = arith.constant 0 : index
      %c0_56 = arith.constant 0 : index
      %105 = vector.load %arg14[%104, %c0_55, %c0_56] : memref<8x8x32xf32, #tpu.memory_space<vmem>>, vector<1x8x32xf32>
      %106 = vector.shape_cast %105 : vector<1x8x32xf32> to vector<8x32xf32>
      %107 = vector.shape_cast %99 : vector<8x32xf32> to vector<1x8x32xf32>
      tpu.vector_store %arg14[%104, %c0_55, %c0_56], %107 {strides = array<i32>} : memref<8x8x32xf32, #tpu.memory_space<vmem>>, vector<1x8x32xf32>,
      scf.yield %74, %72, %99, %97 : vector<8x32xf32>, vector<8x32xf32>, vector<8x32xf32>, vector<8x32xf32>
    }
    %c8_i32_20 = arith.constant 8 : i32
    %c0_21 = arith.constant 0 : index
    %c0_22 = arith.constant 0 : index
    %19 = vector.load %arg7[%c0_21, %c0_22] : memref<32x32xf32, #tpu.memory_space<vmem>>, vector<32x32xf32>
    %cst_23 = arith.constant dense<0.000000e+00> : vector<8x32xf32>
    %20 = tpu.matmul %18#0, %19, %cst_23 {dimension_numbers = #tpu.dot_dimension_numbers<[1], [0], [0], [1], [0, 0, 1, 1], [], []>} : vector<8x32xf32>, vector<32x32xf32>, vector<8x32xf32> -> vector<8x32xf32>
    %c0_24 = arith.constant 0 : index
    %c0_25 = arith.constant 0 : index
    %21 = vector.load %arg8[%c0_24, %c0_25] : memref<32x32xf32, #tpu.memory_space<vmem>>, vector<32x32xf32>
    %cst_26 = arith.constant dense<0.000000e+00> : vector<8x32xf32>
    %22 = tpu.matmul %18#2, %21, %cst_26 {dimension_numbers = #tpu.dot_dimension_numbers<[1], [0], [0], [1], [0, 0, 1, 1], [], []>} : vector<8x32xf32>, vector<32x32xf32>, vector<8x32xf32> -> vector<8x32xf32>
    %23 = arith.addf %20, %22 : vector<8x32xf32>
    %c0_27 = arith.constant 0 : index
    %c0_28 = arith.constant 0 : index
    %24 = vector.load %arg9[%c0_27, %c0_28] : memref<1x32xf32, #tpu.memory_space<vmem>>, vector<1x32xf32>
    %25 = vector.broadcast %24 : vector<1x32xf32> to vector<8x32xf32>
    %26 = arith.addf %23, %25 : vector<8x32xf32>
    %c0_29 = arith.constant 0 : index
    %c0_30 = arith.constant 0 : index
    %27 = vector.load %arg15[%c0_29, %c0_30] : memref<8x32xf32, #tpu.memory_space<vmem>>, vector<8x32xf32>
    tpu.vector_store %arg15[%c0_29, %c0_30], %26 {strides = array<i32>} : memref<8x32xf32, #tpu.memory_space<vmem>>, vector<8x32xf32>,
    %c0_31 = arith.constant 0 : index
    %c0_32 = arith.constant 0 : index
    %28 = vector.load %arg10[%c0_31, %c0_32] : memref<32x32xf32, #tpu.memory_space<vmem>>, vector<32x32xf32>
    %cst_33 = arith.constant dense<0.000000e+00> : vector<8x32xf32>
    %29 = tpu.matmul %18#1, %28, %cst_33 {dimension_numbers = #tpu.dot_dimension_numbers<[1], [0], [0], [1], [0, 0, 1, 1], [], []>} : vector<8x32xf32>, vector<32x32xf32>, vector<8x32xf32> -> vector<8x32xf32>
    %c0_34 = arith.constant 0 : index
    %c0_35 = arith.constant 0 : index
    %30 = vector.load %arg11[%c0_34, %c0_35] : memref<32x32xf32, #tpu.memory_space<vmem>>, vector<32x32xf32>
    %cst_36 = arith.constant dense<0.000000e+00> : vector<8x32xf32>
    %31 = tpu.matmul %18#3, %30, %cst_36 {dimension_numbers = #tpu.dot_dimension_numbers<[1], [0], [0], [1], [0, 0, 1, 1], [], []>} : vector<8x32xf32>, vector<32x32xf32>, vector<8x32xf32> -> vector<8x32xf32>
    %32 = arith.addf %29, %31 : vector<8x32xf32>
    %c0_37 = arith.constant 0 : index
    %c0_38 = arith.constant 0 : index
    %33 = vector.load %arg12[%c0_37, %c0_38] : memref<1x32xf32, #tpu.memory_space<vmem>>, vector<1x32xf32>
    %34 = vector.broadcast %33 : vector<1x32xf32> to vector<8x32xf32>
    %35 = arith.addf %32, %34 : vector<8x32xf32>
    %c0_39 = arith.constant 0 : index
    %c0_40 = arith.constant 0 : index
    %36 = vector.load %arg16[%c0_39, %c0_40] : memref<8x32xf32, #tpu.memory_space<vmem>>, vector<8x32xf32>
    tpu.vector_store %arg16[%c0_39, %c0_40], %35 {strides = array<i32>} : memref<8x32xf32, #tpu.memory_space<vmem>>, vector<8x32xf32>,
    return
  }
}

module attributes {stable_mosaic.version = 11 : i64} {
  func.func @decoder_kernel(%arg0: memref<9x8x1xi32, #tpu.memory_space<vmem>>, %arg1: memref<8x8x32xf32, #tpu.memory_space<vmem>>, %arg2: memref<8x8x32xf32, #tpu.memory_space<vmem>>, %arg3: memref<8x8xf32, #tpu.memory_space<vmem>>, %arg4: memref<8x8xf32, #tpu.memory_space<vmem>>, %arg5: memref<8x32xf32, #tpu.memory_space<vmem>>, %arg6: memref<8x32xf32, #tpu.memory_space<vmem>>, %arg7: memref<1x32xf32, #tpu.memory_space<vmem>>, %arg8: memref<32x16xf32, #tpu.memory_space<vmem>>, %arg9: memref<16x128xf32, #tpu.memory_space<vmem>>, %arg10: memref<32x128xf32, #tpu.memory_space<vmem>>, %arg11: memref<32x128xf32, #tpu.memory_space<vmem>>, %arg12: memref<32x128xf32, #tpu.memory_space<vmem>>, %arg13: memref<1x128xf32, #tpu.memory_space<vmem>>, %arg14: memref<8x8x8xf32, #tpu.memory_space<vmem>>, %arg15: memref<8x8x1xi32, #tpu.memory_space<vmem>>) attributes {dimension_semantics = [], scalar_prefetch = 0 : i64, scratch_operands = 0 : i64, tpu.core_type = #tpu.core_type<tc>} {
    %c0 = arith.constant 0 : index
    %c0_0 = arith.constant 0 : index
    %c0_1 = arith.constant 0 : index
    %0 = vector.load %arg1[%c0, %c0_0, %c0_1] : memref<8x8x32xf32, #tpu.memory_space<vmem>>, vector<8x8x32xf32>
    %c0_2 = arith.constant 0 : index
    %c0_3 = arith.constant 0 : index
    %c0_4 = arith.constant 0 : index
    %1 = vector.load %arg2[%c0_2, %c0_3, %c0_4] : memref<8x8x32xf32, #tpu.memory_space<vmem>>, vector<8x8x32xf32>
    %c0_5 = arith.constant 0 : index
    %c0_6 = arith.constant 0 : index
    %2 = vector.load %arg3[%c0_5, %c0_6] : memref<8x8xf32, #tpu.memory_space<vmem>>, vector<8x8xf32>
    %c0_7 = arith.constant 0 : index
    %c0_8 = arith.constant 0 : index
    %3 = vector.load %arg4[%c0_7, %c0_8] : memref<8x8xf32, #tpu.memory_space<vmem>>, vector<8x8xf32>
    %c0_9 = arith.constant 0 : index
    %c0_10 = arith.constant 0 : index
    %4 = vector.load %arg7[%c0_9, %c0_10] : memref<1x32xf32, #tpu.memory_space<vmem>>, vector<1x32xf32>
    %c0_11 = arith.constant 0 : index
    %c0_12 = arith.constant 0 : index
    %5 = vector.load %arg12[%c0_11, %c0_12] : memref<32x128xf32, #tpu.memory_space<vmem>>, vector<32x128xf32>
    %c0_13 = arith.constant 0 : index
    %c0_14 = arith.constant 0 : index
    %6 = vector.load %arg10[%c0_13, %c0_14] : memref<32x128xf32, #tpu.memory_space<vmem>>, vector<32x128xf32>
    %c0_15 = arith.constant 0 : index
    %c0_16 = arith.constant 0 : index
    %7 = vector.load %arg11[%c0_15, %c0_16] : memref<32x128xf32, #tpu.memory_space<vmem>>, vector<32x128xf32>
    %c0_17 = arith.constant 0 : index
    %c0_18 = arith.constant 0 : index
    %8 = vector.load %arg8[%c0_17, %c0_18] : memref<32x16xf32, #tpu.memory_space<vmem>>, vector<32x16xf32>
    %c0_19 = arith.constant 0 : index
    %c0_20 = arith.constant 0 : index
    %9 = vector.load %arg9[%c0_19, %c0_20] : memref<16x128xf32, #tpu.memory_space<vmem>>, vector<16x128xf32>
    %cst = arith.constant dense<0.000000e+00> : vector<32x128xf32>
    %10 = tpu.matmul %8, %9, %cst {dimension_numbers = #tpu.dot_dimension_numbers<[1], [0], [0], [1], [0, 0, 1, 1], [], []>} : vector<32x16xf32>, vector<16x128xf32>, vector<32x128xf32> -> vector<32x128xf32>
    %c0_21 = arith.constant 0 : index
    %c0_22 = arith.constant 0 : index
    %11 = vector.load %arg13[%c0_21, %c0_22] : memref<1x128xf32, #tpu.memory_space<vmem>>, vector<1x128xf32>
    %12 = vector.shape_cast %11 : vector<1x128xf32> to vector<1x128xf32>
    %13 = vector.broadcast %12 : vector<1x128xf32> to vector<8x128xf32>
    %14 = tpu.iota {dimensions = array<i32: 1>} : vector<8x32xi32>
    %15 = tpu.iota {dimensions = array<i32: 1>} : vector<8x8xi32>
    %16 = arith.sitofp %15 : vector<8x8xi32> to vector<8x8xf32>
    %c0_23 = arith.constant 0 : index
    %c0_24 = arith.constant 0 : index
    %c0_25 = arith.constant 0 : index
    %17 = vector.load %arg0[%c0_23, %c0_24, %c0_25] : memref<9x8x1xi32, #tpu.memory_space<vmem>>, vector<1x8x1xi32>
    %18 = vector.shape_cast %17 : vector<1x8x1xi32> to vector<8x1xi32>
    %c0_26 = arith.constant 0 : index
    %c0_27 = arith.constant 0 : index
    %19 = vector.load %arg5[%c0_26, %c0_27] : memref<8x32xf32, #tpu.memory_space<vmem>>, vector<8x32xf32>
    %c0_28 = arith.constant 0 : index
    %c0_29 = arith.constant 0 : index
    %20 = vector.load %arg6[%c0_28, %c0_29] : memref<8x32xf32, #tpu.memory_space<vmem>>, vector<8x32xf32>
    %cst_30 = arith.constant 8.000000e+00 : f32
    %c0_i32 = arith.constant 0 : i32
    %c8_i32 = arith.constant 8 : i32
    %21 = arith.addi %c0_i32, %c8_i32 : i32
    %c1_i32 = arith.constant 1 : i32
    %22:3 = scf.for %arg16 = %c0_i32 to %21 step %c1_i32 iter_args(%arg17 = %18, %arg18 = %19, %arg19 = %20) -> (vector<8x1xi32>, vector<8x32xf32>, vector<8x32xf32>)  : i32 {
      %23 = vector.broadcast %arg17 : vector<8x1xi32> to vector<8x32xi32>
      %24 = arith.cmpi eq, %23, %14 : vector<8x32xi32>
      %25 = arith.extui %24 : vector<8x32xi1> to vector<8x32xi32>
      %26 = arith.sitofp %25 : vector<8x32xi32> to vector<8x32xf32>
      %cst_32 = arith.constant dense<0.000000e+00> : vector<8x128xf32>
      %27 = tpu.matmul %26, %10, %cst_32 {dimension_numbers = #tpu.dot_dimension_numbers<[1], [0], [0], [1], [0, 0, 1, 1], [], []>} : vector<8x32xf32>, vector<32x128xf32>, vector<8x128xf32> -> vector<8x128xf32>
      %cst_33 = arith.constant dense<0.000000e+00> : vector<8x1xf32>
      %28 = tpu.matmul %arg18, %4, %cst_33 {dimension_numbers = #tpu.dot_dimension_numbers<[1], [1], [0], [0], [0, 0, 1, 0], [], []>} : vector<8x32xf32>, vector<1x32xf32>, vector<8x1xf32> -> vector<8x1xf32>
      %cst_34 = arith.constant dense<0.000000e+00> : vector<1x8xf32>
      %29 = tpu.matmul %4, %arg18, %cst_34 {dimension_numbers = #tpu.dot_dimension_numbers<[1], [1], [0], [0], [0, 0, 1, 0], [], []>} : vector<1x32xf32>, vector<8x32xf32>, vector<1x8xf32> -> vector<1x8xf32>
      %30 = vector.broadcast %28 : vector<8x1xf32> to vector<8x8xf32>
      %31 = arith.addf %3, %30 : vector<8x8xf32>
      %cst_35 = arith.constant 0.000000e+00 : f32
      %32 = vector.broadcast %cst_35 : f32 to vector<8x8xf32>
      %33 = arith.maximumf %31, %32 : vector<8x8xf32>
      %34 = arith.index_cast %arg16 : i32 to index
      %c0_36 = arith.constant 0 : index
      %c0_37 = arith.constant 0 : index
      %35 = vector.load %arg14[%34, %c0_36, %c0_37] : memref<8x8x8xf32, #tpu.memory_space<vmem>>, vector<1x8x8xf32>
      %36 = vector.shape_cast %35 : vector<1x8x8xf32> to vector<8x8xf32>
      %37 = vector.shape_cast %33 : vector<8x8xf32> to vector<1x8x8xf32>
      tpu.vector_store %arg14[%34, %c0_36, %c0_37], %37 {strides = array<i32>} : memref<8x8x8xf32, #tpu.memory_space<vmem>>, vector<1x8x8xf32>,
      %38 = vector.broadcast %29 : vector<1x8xf32> to vector<8x8xf32>
      %39 = arith.addf %2, %38 : vector<8x8xf32>
      %cst_38 = arith.constant 0.000000e+00 : f32
      %40 = vector.broadcast %cst_38 : f32 to vector<8x8xf32>
      %41 = arith.maximumf %39, %40 : vector<8x8xf32>
      %cst_39 = arith.constant dense<0xFF800000> : vector<8xf32>
      %42 = vector.multi_reduction <maximumf>, %41, %cst_39 [0] : vector<8x8xf32> to vector<8xf32>
      %43 = vector.shape_cast %42 : vector<8xf32> to vector<1x8xf32>
      %44 = vector.broadcast %43 : vector<1x8xf32> to vector<8x8xf32>
      %45 = arith.subf %41, %44 : vector<8x8xf32>
      %46 = math.exp %45 : vector<8x8xf32>
      %cst_40 = arith.constant dense<0.000000e+00> : vector<8xf32>
      %47 = vector.multi_reduction <add>, %46, %cst_40 [0] : vector<8x8xf32> to vector<8xf32>
      %48 = vector.shape_cast %47 : vector<8xf32> to vector<1x8xf32>
      %49 = vector.broadcast %48 : vector<1x8xf32> to vector<8x8xf32>
      %50 = arith.divf %46, %49 : vector<8x8xf32>
      %cst_41 = arith.constant dense<0xFF800000> : vector<8xf32>
      %51 = vector.multi_reduction <maximumf>, %33, %cst_41 [1] : vector<8x8xf32> to vector<8xf32>
      %52 = vector.shape_cast %51 : vector<8xf32> to vector<8x1xf32>
      %53 = vector.broadcast %52 : vector<8x1xf32> to vector<8x8xf32>
      %54 = arith.cmpf oge, %33, %53 : vector<8x8xf32>
      %55 = vector.broadcast %cst_30 : f32 to vector<8x8xf32>
      %56 = arith.select %54, %16, %55 : vector<8x8xi1>, vector<8x8xf32>
      %cst_42 = arith.constant dense<0x7F800000> : vector<8xf32>
      %57 = vector.multi_reduction <minimumf>, %56, %cst_42 [1] : vector<8x8xf32> to vector<8xf32>
      %58 = vector.shape_cast %57 : vector<8xf32> to vector<8x1xf32>
      %59 = arith.fptosi %58 : vector<8x1xf32> to vector<8x1xi32>
      %60 = arith.index_cast %arg16 : i32 to index
      %c0_43 = arith.constant 0 : index
      %c0_44 = arith.constant 0 : index
      %61 = vector.load %arg15[%60, %c0_43, %c0_44] : memref<8x8x1xi32, #tpu.memory_space<vmem>>, vector<1x8x1xi32>
      %62 = vector.shape_cast %61 : vector<1x8x1xi32> to vector<8x1xi32>
      %63 = vector.shape_cast %59 : vector<8x1xi32> to vector<1x8x1xi32>
      tpu.vector_store %arg15[%60, %c0_43, %c0_44], %63 {strides = array<i32>} : memref<8x8x1xi32, #tpu.memory_space<vmem>>, vector<1x8x1xi32>,
      %64 = vector.shape_cast %50 : vector<8x8xf32> to vector<8x8x1xf32>
      %65 = vector.broadcast %64 : vector<8x8x1xf32> to vector<8x8x32xf32>
      %66 = arith.mulf %65, %0 : vector<8x8x32xf32>
      %cst_45 = arith.constant dense<0.000000e+00> : vector<8x32xf32>
      %67 = vector.multi_reduction <add>, %66, %cst_45 [0] : vector<8x8x32xf32> to vector<8x32xf32>
      %68 = vector.shape_cast %50 : vector<8x8xf32> to vector<8x8x1xf32>
      %69 = vector.broadcast %68 : vector<8x8x1xf32> to vector<8x8x32xf32>
      %70 = arith.mulf %69, %1 : vector<8x8x32xf32>
      %cst_46 = arith.constant dense<0.000000e+00> : vector<8x32xf32>
      %71 = vector.multi_reduction <add>, %70, %cst_46 [0] : vector<8x8x32xf32> to vector<8x32xf32>
      %cst_47 = arith.constant dense<0.000000e+00> : vector<8x128xf32>
      %72 = tpu.matmul %67, %6, %cst_47 {dimension_numbers = #tpu.dot_dimension_numbers<[1], [0], [0], [1], [0, 0, 1, 1], [], []>} : vector<8x32xf32>, vector<32x128xf32>, vector<8x128xf32> -> vector<8x128xf32>
      %cst_48 = arith.constant dense<0.000000e+00> : vector<8x128xf32>
      %73 = tpu.matmul %71, %7, %cst_48 {dimension_numbers = #tpu.dot_dimension_numbers<[1], [0], [0], [1], [0, 0, 1, 1], [], []>} : vector<8x32xf32>, vector<32x128xf32>, vector<8x128xf32> -> vector<8x128xf32>
      %74 = arith.addf %72, %73 : vector<8x128xf32>
      %cst_49 = arith.constant dense<0.000000e+00> : vector<8x128xf32>
      %75 = tpu.matmul %arg18, %5, %cst_49 {dimension_numbers = #tpu.dot_dimension_numbers<[1], [0], [0], [1], [0, 0, 1, 1], [], []>} : vector<8x32xf32>, vector<32x128xf32>, vector<8x128xf32> -> vector<8x128xf32>
      %76 = arith.addf %74, %75 : vector<8x128xf32>
      %77 = arith.addf %76, %27 : vector<8x128xf32>
      %78 = arith.addf %77, %13 : vector<8x128xf32>
      %79 = vector.extract_strided_slice %78 {offsets = [0, 0], sizes = [8, 32], strides = [1, 1]} : vector<8x128xf32> to vector<8x32xf32>
      %80 = arith.negf %79 : vector<8x32xf32>
      %81 = math.exp %80 : vector<8x32xf32>
      %cst_50 = arith.constant 1.000000e+00 : f32
      %82 = vector.broadcast %cst_50 : f32 to vector<8x32xf32>
      %83 = arith.addf %82, %81 : vector<8x32xf32>
      %84 = arith.divf %82, %83 : vector<8x32xf32>
      %85 = vector.extract_strided_slice %78 {offsets = [0, 32], sizes = [8, 32], strides = [1, 1]} : vector<8x128xf32> to vector<8x32xf32>
      %86 = arith.negf %85 : vector<8x32xf32>
      %87 = math.exp %86 : vector<8x32xf32>
      %cst_51 = arith.constant 1.000000e+00 : f32
      %88 = vector.broadcast %cst_51 : f32 to vector<8x32xf32>
      %89 = arith.addf %88, %87 : vector<8x32xf32>
      %90 = arith.divf %88, %89 : vector<8x32xf32>
      %91 = vector.extract_strided_slice %78 {offsets = [0, 64], sizes = [8, 32], strides = [1, 1]} : vector<8x128xf32> to vector<8x32xf32>
      %92 = math.tanh %91 : vector<8x32xf32>
      %93 = vector.extract_strided_slice %78 {offsets = [0, 96], sizes = [8, 32], strides = [1, 1]} : vector<8x128xf32> to vector<8x32xf32>
      %94 = arith.negf %93 : vector<8x32xf32>
      %95 = math.exp %94 : vector<8x32xf32>
      %cst_52 = arith.constant 1.000000e+00 : f32
      %96 = vector.broadcast %cst_52 : f32 to vector<8x32xf32>
      %97 = arith.addf %96, %95 : vector<8x32xf32>
      %98 = arith.divf %96, %97 : vector<8x32xf32>
      %99 = arith.mulf %90, %arg19 : vector<8x32xf32>
      %100 = arith.mulf %84, %92 : vector<8x32xf32>
      %101 = arith.addf %99, %100 : vector<8x32xf32>
      %102 = math.tanh %101 : vector<8x32xf32>
      %103 = arith.mulf %98, %102 : vector<8x32xf32>
      %c1_i32_53 = arith.constant 1 : i32
      %104 = arith.addi %arg16, %c1_i32_53 : i32
      %105 = arith.index_cast %104 : i32 to index
      %c0_54 = arith.constant 0 : index
      %c0_55 = arith.constant 0 : index
      %106 = vector.load %arg0[%105, %c0_54, %c0_55] : memref<9x8x1xi32, #tpu.memory_space<vmem>>, vector<1x8x1xi32>
      %107 = vector.shape_cast %106 : vector<1x8x1xi32> to vector<8x1xi32>
      %c0_i32_56 = arith.constant 0 : i32
      %108 = vector.broadcast %c0_i32_56 : i32 to vector<8x1xi32>
      %109 = arith.cmpi sge, %107, %108 : vector<8x1xi32>
      %110 = arith.select %109, %107, %59 : vector<8x1xi1>, vector<8x1xi32>
      scf.yield %110, %103, %101 : vector<8x1xi32>, vector<8x32xf32>, vector<8x32xf32>
    }
    %c8_i32_31 = arith.constant 8 : i32
    return
  }
}

</mosaic_0001>

<llo_original>
// kernel: seq2seq_forward.3
$region0: #{seq2seq_forward.3}
  #allocation0 [shape = 'u32[]', space=smem, size = 0x4, offset = 0x4, fixed_abs, tag = 'smem constant byte address 0x4 - core index']
  #allocation1 [shape = 'u32[144,128]{1,0:T(1,128)}', space=vmem, size = 0x12000, scoped, tag = 'internal scratch']
  %s0 = inlined_call_operand.vmem [shape: s32[9,8,1], index: 0, kind: input, shape index: {}]
  %s1 = inlined_call_operand.vmem [shape: f32[8,8,32], index: 1, kind: input, shape index: {}]
  %s2 = inlined_call_operand.vmem [shape: f32[8,8,32], index: 2, kind: input, shape index: {}]
  %s3 = inlined_call_operand.vmem [shape: f32[8,8], index: 3, kind: input, shape index: {}]
  %s4 = inlined_call_operand.vmem [shape: f32[8,8], index: 4, kind: input, shape index: {}]
  %s5 = inlined_call_operand.vmem [shape: f32[8,32], index: 5, kind: input, shape index: {}]
  %s6 = inlined_call_operand.vmem [shape: f32[8,32], index: 6, kind: input, shape index: {}]
  %s7 = inlined_call_operand.vmem [shape: f32[1,32], index: 7, kind: input, shape index: {}]
  %s8 = inlined_call_operand.vmem [shape: f32[32,16], index: 8, kind: input, shape index: {}]
  %s9 = inlined_call_operand.vmem [shape: f32[16,128], index: 9, kind: input, shape index: {}]
  %s10 = inlined_call_operand.vmem [shape: f32[32,128], index: 10, kind: input, shape index: {}]
  %s11 = inlined_call_operand.vmem [shape: f32[32,128], index: 11, kind: input, shape index: {}]
  %s12 = inlined_call_operand.vmem [shape: f32[32,128], index: 12, kind: input, shape index: {}]
  %s13 = inlined_call_operand.vmem [shape: f32[1,128], index: 13, kind: input, shape index: {}]
  %s14 = inlined_call_operand.vmem [shape: f32[8,8,8], index: 14, kind: output, shape index: {0}]
  %s15 = inlined_call_operand.vmem [shape: s32[8,8,1], index: 15, kind: output, shape index: {1}]
  %16 = xla_tuple %s14, %s15
  %s17 = sld [smem:[#allocation0]]
  $region81: #{seq2seq_forward.3} parent=0
    _
  %s19 = ssub.s32 1, %s17
  %s20 = scalar_select 0, %s19, %s17
  // Predicated region
  $region2: #{seq2seq_forward.3} parent=0 // pred_check
    _
  $region3: #{seq2seq_forward.3} parent=0 // pred_check_branch
    %22 = sbr.rel (0) target = $region5
  $region4: #{seq2seq_forward.3} parent=0 // pred_region
    _
  $region5: #{seq2seq_forward.3} parent=0 // pred_fallthru
    _
  // Predicated region
  $region6: #{seq2seq_forward.3} parent=0 // pred_check
    _
  $region7: #{seq2seq_forward.3} parent=0 // pred_check_branch
    %24 = sbr.rel (0) target = $region9
  $region8: #{seq2seq_forward.3} parent=0 // pred_region
    _
  $region9: #{seq2seq_forward.3} parent=0 // pred_fallthru
    _
  // Predicated region
  $region10: #{seq2seq_forward.3} parent=0 // pred_check
    _
  $region11: #{seq2seq_forward.3} parent=0 // pred_check_branch
    %26 = sbr.rel (0) target = $region13
  $region12: #{seq2seq_forward.3} parent=0 // pred_region
    _
  $region13: #{seq2seq_forward.3} parent=0 // pred_fallthru
    _
  // Predicated region
  $region14: #{seq2seq_forward.3} parent=0 // pred_check
    _
  $region15: #{seq2seq_forward.3} parent=0 // pred_check_branch
    %28 = sbr.rel (0) target = $region17
  $region16: #{seq2seq_forward.3} parent=0 // pred_region
    _
  $region17: #{seq2seq_forward.3} parent=0 // pred_fallthru
    _
  // Predicated region
  $region18: #{seq2seq_forward.3} parent=0 // pred_check
    _
  $region19: #{seq2seq_forward.3} parent=0 // pred_check_branch
    %30 = sbr.rel (0) target = $region21
  $region20: #{seq2seq_forward.3} parent=0 // pred_region
    _
  $region21: #{seq2seq_forward.3} parent=0 // pred_fallthru
    _
  // Predicated region
  $region22: #{seq2seq_forward.3} parent=0 // pred_check
    _
  $region23: #{seq2seq_forward.3} parent=0 // pred_check_branch
    %32 = sbr.rel (0) target = $region25
  $region24: #{seq2seq_forward.3} parent=0 // pred_region
    _
  $region25: #{seq2seq_forward.3} parent=0 // pred_fallthru
    _
  // Predicated region
  $region26: #{seq2seq_forward.3} parent=0 // pred_check
    _
  $region27: #{seq2seq_forward.3} parent=0 // pred_check_branch
    %34 = sbr.rel (0) target = $region29
  $region28: #{seq2seq_forward.3} parent=0 // pred_region
    _
  $region29: #{seq2seq_forward.3} parent=0 // pred_fallthru
    _
  // Predicated region
  $region30: #{seq2seq_forward.3} parent=0 // pred_check
    _
  $region31: #{seq2seq_forward.3} parent=0 // pred_check_branch
    %36 = sbr.rel (0) target = $region33
  $region32: #{seq2seq_forward.3} parent=0 // pred_region
    _
  $region33: #{seq2seq_forward.3} parent=0 // pred_fallthru
    _
  // Predicated region
  $region34: #{seq2seq_forward.3} parent=0 // pred_check
    _
  $region35: #{seq2seq_forward.3} parent=0 // pred_check_branch
    %38 = sbr.rel (0) target = $region37
  $region36: #{seq2seq_forward.3} parent=0 // pred_region
    _
  $region37: #{seq2seq_forward.3} parent=0 // pred_fallthru
    _
  // Predicated region
  $region38: #{seq2seq_forward.3} parent=0 // pred_check
    _
  $region39: #{seq2seq_forward.3} parent=0 // pred_check_branch
    %40 = sbr.rel (0) target = $region41
  $region40: #{seq2seq_forward.3} parent=0 // pred_region
    _
  $region41: #{seq2seq_forward.3} parent=0 // pred_fallthru
    _
  // Predicated region
  $region42: #{seq2seq_forward.3} parent=0 // pred_check
    _
  $region43: #{seq2seq_forward.3} parent=0 // pred_check_branch
    %42 = sbr.rel (0) target = $region45
  $region44: #{seq2seq_forward.3} parent=0 // pred_region
    _
  $region45: #{seq2seq_forward.3} parent=0 // pred_fallthru
    _
  // Predicated region
  $region46: #{seq2seq_forward.3} parent=0 // pred_check
    _
  $region47: #{seq2seq_forward.3} parent=0 // pred_check_branch
    %44 = sbr.rel (0) target = $region49
  $region48: #{seq2seq_forward.3} parent=0 // pred_region
    _
  $region49: #{seq2seq_forward.3} parent=0 // pred_fallthru
    _
  // Predicated region
  $region50: #{seq2seq_forward.3} parent=0 // pred_check
    _
  $region51: #{seq2seq_forward.3} parent=0 // pred_check_branch
    %46 = sbr.rel (0) target = $region53
  $region52: #{seq2seq_forward.3} parent=0 // pred_region
    _
  $region53: #{seq2seq_forward.3} parent=0 // pred_fallthru
    _
  // Predicated region
  $region54: #{seq2seq_forward.3} parent=0 // pred_check
    _
  $region55: #{seq2seq_forward.3} parent=0 // pred_check_branch
    %48 = sbr.rel (0) target = $region57
  $region56: #{seq2seq_forward.3} parent=0 // pred_region
    _
  $region57: #{seq2seq_forward.3} parent=0 // pred_fallthru
    _
  %v49 = vld [vmem:[%s1] sm:$0xff]
  %v50 = vld [vmem:[%s1 + $0x8] sm:$0xff]
  %v51 = vld [vmem:[%s1 + $0x10] sm:$0xff]
  %v52 = vld [vmem:[%s1 + $0x18] sm:$0xff]
  %v53 = vld [vmem:[%s1 + $0x20] sm:$0xff]
  %v54 = vld [vmem:[%s1 + $0x28] sm:$0xff]
  %v55 = vld [vmem:[%s1 + $0x30] sm:$0xff]
  %v56 = vld [vmem:[%s1 + $0x38] sm:$0xff]
  %v57 = vld [vmem:[%s2] sm:$0xff]
  %v58 = vld [vmem:[%s2 + $0x8] sm:$0xff]
  %v59 = vld [vmem:[%s2 + $0x10] sm:$0xff]
  %v60 = vld [vmem:[%s2 + $0x18] sm:$0xff]
  %v61 = vld [vmem:[%s2 + $0x20] sm:$0xff]
  %v62 = vld [vmem:[%s2 + $0x28] sm:$0xff]
  %v63 = vld [vmem:[%s2 + $0x30] sm:$0xff]
  %v64 = vld [vmem:[%s2 + $0x38] sm:$0xff]
  %v65 = vld [vmem:[%s3] sm:$0xff]
  %v66 = vld [vmem:[%s4] sm:$0xff]
  %v67 = vld [vmem:[%s7] sm:$0x1]
  %v68 = vld [vmem:[%s12] sm:$0xff]
  %v69 = vld [vmem:[%s12 + $0x8] sm:$0xff]
  %v70 = vld [vmem:[%s12 + $0x10] sm:$0xff]
  %v71 = vld [vmem:[%s12 + $0x18] sm:$0xff]
  %v72 = vld [vmem:[%s10] sm:$0xff]
  %v73 = vld [vmem:[%s10 + $0x8] sm:$0xff]
  %v74 = vld [vmem:[%s10 + $0x10] sm:$0xff]
  %v75 = vld [vmem:[%s10 + $0x18] sm:$0xff]
  %v76 = vld [vmem:[%s11] sm:$0xff]
  %v77 = vld [vmem:[%s11 + $0x8] sm:$0xff]
  %v78 = vld [vmem:[%s11 + $0x10] sm:$0xff]
  %v79 = vld [vmem:[%s11 + $0x18] sm:$0xff]
  %v80 = vld [vmem:[%s8] sm:$0xff]
  %v81 = vld [vmem:[%s8 + $0x8] sm:$0xff]
  %v82 = vld [vmem:[%s8 + $0x10] sm:$0xff]
  %v83 = vld [vmem:[%s8 + $0x18] sm:$0xff]
  %v84 = vld [vmem:[%s9] sm:$0xff]
  %v85 = vld [vmem:[%s9 + $0x8] sm:$0xff]
  %vm86 = vcmask 130048
  %v88 = vsel %vm86, %v80, 0
  %v91 = vsel %vm86, %v81, 0
  %v94 = vsel %vm86, %v82, 0
  %v97 = vsel %vm86, %v83, 0
  %99 = vmatprep.subr.mxu0 0.0
  %100 = vmatpush1.msra.mxu0 %v84
  %101 = vmatprep.subr.mxu0 0.0
  %102 = vmatpush1.msra.mxu0 %v85
  %103 = vmatprep.subr.mxu0 0.0
  %104 = vmatpush1.msra.mxu0 0.0
  %105 = vmatprep.subr.mxu0 0.0
  %106 = vmatpush1.msra.mxu0 0.0
  %107 = vmatprep.subr.mxu0 0.0
  %108 = vmatpush1.msra.mxu0 0.0
  %109 = vmatprep.subr.mxu0 0.0
  %110 = vmatpush1.msra.mxu0 0.0
  %111 = vmatprep.subr.mxu0 0.0
  %112 = vmatpush1.msra.mxu0 0.0
  %113 = vmatprep.subr.mxu0 0.0
  %114 = vmatpush1.msra.mxu0 0.0
  %115 = vmatprep.subr.mxu0 0.0
  %116 = vmatpush1.msra.mxu0 0.0
  %117 = vmatprep.subr.mxu0 0.0
  %118 = vmatpush1.msra.mxu0 0.0
  %119 = vmatprep.subr.mxu0 0.0
  %120 = vmatpush1.msra.mxu0 0.0
  %121 = vmatprep.subr.mxu0 0.0
  %122 = vmatpush1.msra.mxu0 0.0
  %123 = vmatprep.subr.mxu0 0.0
  %124 = vmatpush1.msra.mxu0 0.0
  %125 = vmatprep.subr.mxu0 0.0
  %126 = vmatpush1.msra.mxu0 0.0
  %127 = vmatprep.subr.mxu0 0.0
  %128 = vmatpush1.msra.mxu0 0.0
  %129 = vmatprep.subr.mxu0 0.0
  %130 = vmatpush1.msra.mxu0 0.0
  %131 = vmatprep.subr.mxu0 0.0
  %132 = vmatpush1.msra.mxu0 0.0
  %133 = vmatprep.subr.mxu0 0.0
  %134 = vmatpush1.msra.mxu0 0.0
  %135 = vmatprep.subr.mxu0 0.0
  %136 = vmatpush1.msra.mxu0 0.0
  %137 = vmatprep.subr.mxu0 0.0
  %138 = vmatpush1.msra.mxu0 0.0
  %139 = vmatprep.subr.mxu0 0.0
  %140 = vmatpush1.msra.mxu0 0.0
  %141 = vmatprep.subr.mxu0 0.0
  %142 = vmatpush1.msra.mxu0 0.0
  %143 = vmatprep.subr.mxu0 0.0
  %144 = vmatpush1.msra.mxu0 0.0
  %145 = vmatprep.subr.mxu0 0.0
  %146 = vmatpush1.msra.mxu0 0.0
  %147 = vmatprep.subr.mxu0 0.0
  %148 = vmatpush1.msra.mxu0 0.0
  %149 = vmatprep.subr.mxu0 0.0
  %150 = vmatpush1.msra.mxu0 0.0
  %151 = vmatprep.subr.mxu0 0.0
  %152 = vmatpush1.msra.mxu0 0.0
  %153 = vmatprep.subr.mxu0 0.0
  %154 = vmatpush1.msra.mxu0 0.0
  %155 = vmatprep.subr.mxu0 0.0
  %156 = vmatpush1.msra.mxu0 0.0
  %157 = vmatprep.subr.mxu0 0.0
  %158 = vmatpush1.msra.mxu0 0.0
  %159 = vmatprep.subr.mxu0 0.0
  %160 = vmatpush1.msra.mxu0 0.0
  %161 = vmatprep.subr.mxu0 0.0
  %162 = vmatpush1.msra.mxu0 0.0
  %163 = vmatprep.mubr.f32.mxu0 0.0
  %164 = vmatmul.mubr.f32.gmra.mrb[0].mxu0 %v88
  %v165 = vpop.f32.mrb[0].mxu0
  %v166 = vadd.f32 0.0, %v165
  %v167 = vpop.f32.mrb[0].mxu0
  %168 = vmatprep.mubr.f32.mxu0 0.0
  %169 = vmatmul.mubr.f32.gmra.mrb[0].mxu0 %v91
  %v170 = vpop.f32.mrb[0].mxu0
  %v171 = vadd.f32 0.0, %v170
  %v172 = vpop.f32.mrb[0].mxu0
  %173 = vmatprep.mubr.f32.mxu0 0.0
  %174 = vmatmul.mubr.f32.gmra.mrb[0].mxu0 %v94
  %v175 = vpop.f32.mrb[0].mxu0
  %v176 = vadd.f32 0.0, %v175
  %v177 = vpop.f32.mrb[0].mxu0
  %178 = vmatprep.mubr.f32.mxu0 0.0
  %179 = vmatmul.mubr.f32.gmra.mrb[0].mxu0 %v97
  %v180 = vpop.f32.mrb[0].mxu0
  %v181 = vadd.f32 0.0, %v180
  %v182 = vpop.f32.mrb[0].mxu0
  %183 = vdwg.mxu0
  %v184 = vld [vmem:[%s13] sm:$0x1]
  %v186 = vlaneseq
  %v187 = vshrl.u32 %v186, 7
  %v188 = vsub.s32 0, %v187
  %v189 = vrot.slane %v184, %v188
  %v191 = vlaneseq
  %v192 = vand.u32 %v191, 127
  %v193 = vcvt.s32.f32 %v192
  %v194 = vld [vmem:[%s0] sm:$0xff]
  %v195 = vld [vmem:[%s5] sm:$0xff]
  %v196 = vld [vmem:[%s6] sm:$0xff]
  loop: start=0, step=1, limit=8
  $region58: #{seq2seq_forward.3} parent=0 // loop_pre_header
    _
  $region59: #{seq2seq_forward.3} parent=0 // loop_header
    %s198 = sphi 0, %s202
    %p199 = scmp.ge.s32.totalorder %s198, 8
    %v203 = vphi %v194, %v768
    %v204 = vphi %v195, %v771
    %v205 = vphi %v196, %v775
  $region60: #{seq2seq_forward.3} parent=0 // loop_header_branch
    %201 = sbr.rel (%p199) target = $region64
  $region61: #{seq2seq_forward.3} parent=0 // loop_body
    %206 = vset.pattern.permute.xlu0 0
    %207 = vperm.xlu0 %206, %v203
    %v208 = vpop.permute.xlu0 %207
    %vm209 = vcmp.eq.s32.totalorder %v208, %v192
    %v210 = vsel %vm209, 1, 0
    %v211 = vcvt.s32.f32 %v210
    %vm212 = vcmask 261120
    %v214 = vsel %vm212, %v211, 0
    %216 = vmatprep.subr.mxu0 0.0
    %217 = vmatpush1.msra.mxu0 %v166
    %218 = vmatprep.subr.mxu0 0.0
    %219 = vmatpush1.msra.mxu0 %v171
    %220 = vmatprep.subr.mxu0 0.0
    %221 = vmatpush1.msra.mxu0 %v176
    %222 = vmatprep.subr.mxu0 0.0
    %223 = vmatpush1.msra.mxu0 %v181
    %224 = vmatprep.subr.mxu0 0.0
    %225 = vmatpush1.msra.mxu0 0.0
    %226 = vmatprep.subr.mxu0 0.0
    %227 = vmatpush1.msra.mxu0 0.0
    %228 = vmatprep.subr.mxu0 0.0
    %229 = vmatpush1.msra.mxu0 0.0
    %230 = vmatprep.subr.mxu0 0.0
    %231 = vmatpush1.msra.mxu0 0.0
    %232 = vmatprep.subr.mxu0 0.0
    %233 = vmatpush1.msra.mxu0 0.0
    %234 = vmatprep.subr.mxu0 0.0
    %235 = vmatpush1.msra.mxu0 0.0
    %236 = vmatprep.subr.mxu0 0.0
    %237 = vmatpush1.msra.mxu0 0.0
    %238 = vmatprep.subr.mxu0 0.0
    %239 = vmatpush1.msra.mxu0 0.0
    %240 = vmatprep.subr.mxu0 0.0
    %241 = vmatpush1.msra.mxu0 0.0
    %242 = vmatprep.subr.mxu0 0.0
    %243 = vmatpush1.msra.mxu0 0.0
    %244 = vmatprep.subr.mxu0 0.0
    %245 = vmatpush1.msra.mxu0 0.0
    %246 = vmatprep.subr.mxu0 0.0
    %247 = vmatpush1.msra.mxu0 0.0
    %248 = vmatprep.subr.mxu0 0.0
    %249 = vmatpush1.msra.mxu0 0.0
    %250 = vmatprep.subr.mxu0 0.0
    %251 = vmatpush1.msra.mxu0 0.0
    %252 = vmatprep.subr.mxu0 0.0
    %253 = vmatpush1.msra.mxu0 0.0
    %254 = vmatprep.subr.mxu0 0.0
    %255 = vmatpush1.msra.mxu0 0.0
    %256 = vmatprep.subr.mxu0 0.0
    %257 = vmatpush1.msra.mxu0 0.0
    %258 = vmatprep.subr.mxu0 0.0
    %259 = vmatpush1.msra.mxu0 0.0
    %260 = vmatprep.subr.mxu0 0.0
    %261 = vmatpush1.msra.mxu0 0.0
    %262 = vmatprep.subr.mxu0 0.0
    %263 = vmatpush1.msra.mxu0 0.0
    %264 = vmatprep.subr.mxu0 0.0
    %265 = vmatpush1.msra.mxu0 0.0
    %266 = vmatprep.subr.mxu0 0.0
    %267 = vmatpush1.msra.mxu0 0.0
    %268 = vmatprep.subr.mxu0 0.0
    %269 = vmatpush1.msra.mxu0 0.0
    %270 = vmatprep.subr.mxu0 0.0
    %271 = vmatpush1.msra.mxu0 0.0
    %272 = vmatprep.subr.mxu0 0.0
    %273 = vmatpush1.msra.mxu0 0.0
    %274 = vmatprep.subr.mxu0 0.0
    %275 = vmatpush1.msra.mxu0 0.0
    %276 = vmatprep.subr.mxu0 0.0
    %277 = vmatpush1.msra.mxu0 0.0
    %278 = vmatprep.subr.mxu0 0.0
    %279 = vmatpush1.msra.mxu0 0.0
    %280 = vmatprep.mubr.f32.mxu0 0.0
    %281 = vmatmul.mubr.f32.gmra.mrb[0].mxu0 %v214
    %v282 = vpop.f32.mrb[0].mxu0
    %v283 = vadd.f32 0.0, %v282
    %v284 = vpop.f32.mrb[0].mxu0
    %285 = vdwg.mxu0
    %v287 = vlaneseq
    %v288 = vshrl.u32 %v287, 7
    %v289 = vsub.s32 0, %v288
    %v290 = vrot.slane %v67, %v289
    %v292 = vmul.f32 %v204, %v290
    %v293 = vsel %vm212, %v292, 0.0
    %294 = vadd.xlane.f32.xlu0 %v293
    %v295 = vpop.xlane.xlu0 %294
    %v296 = vsel %vm212, %v67, 0
    %v299 = vsel %vm212, %v204, 0
    %301 = vmatprep.subr.mxu0 0.0
    %302 = vmatpush1.xpose.msra.mxu0 %v299
    %303 = vmatprep.subr.mxu0 0.0
    %304 = vmatpush1.xpose.msra.mxu0 0.0
    %305 = vmatprep.subr.mxu0 0.0
    %306 = vmatpush1.xpose.msra.mxu0 0.0
    %307 = vmatprep.subr.mxu0 0.0
    %308 = vmatpush1.xpose.msra.mxu0 0.0
    %309 = vmatprep.subr.mxu0 0.0
    %310 = vmatpush1.xpose.msra.mxu0 0.0
    %311 = vmatprep.subr.mxu0 0.0
    %312 = vmatpush1.xpose.msra.mxu0 0.0
    %313 = vmatprep.subr.mxu0 0.0
    %314 = vmatpush1.xpose.msra.mxu0 0.0
    %315 = vmatprep.subr.mxu0 0.0
    %316 = vmatpush1.xpose.msra.mxu0 0.0
    %317 = vmatprep.subr.mxu0 0.0
    %318 = vmatpush1.xpose.msra.mxu0 0.0
    %319 = vmatprep.subr.mxu0 0.0
    %320 = vmatpush1.xpose.msra.mxu0 0.0
    %321 = vmatprep.subr.mxu0 0.0
    %322 = vmatpush1.xpose.msra.mxu0 0.0
    %323 = vmatprep.subr.mxu0 0.0
    %324 = vmatpush1.xpose.msra.mxu0 0.0
    %325 = vmatprep.subr.mxu0 0.0
    %326 = vmatpush1.xpose.msra.mxu0 0.0
    %327 = vmatprep.subr.mxu0 0.0
    %328 = vmatpush1.xpose.msra.mxu0 0.0
    %329 = vmatprep.subr.mxu0 0.0
    %330 = vmatpush1.xpose.msra.mxu0 0.0
    %331 = vmatprep.subr.mxu0 0.0
    %332 = vmatpush1.xpose.msra.mxu0 0.0
    %333 = vmatprep.subr.mxu0 0.0
    %334 = vmatpush1.xpose.msra.mxu0 0.0
    %335 = vmatprep.subr.mxu0 0.0
    %336 = vmatpush1.xpose.msra.mxu0 0.0
    %337 = vmatprep.subr.mxu0 0.0
    %338 = vmatpush1.xpose.msra.mxu0 0.0
    %339 = vmatprep.subr.mxu0 0.0
    %340 = vmatpush1.xpose.msra.mxu0 0.0
    %341 = vmatprep.subr.mxu0 0.0
    %342 = vmatpush1.xpose.msra.mxu0 0.0
    %343 = vmatprep.subr.mxu0 0.0
    %344 = vmatpush1.xpose.msra.mxu0 0.0
    %345 = vmatprep.subr.mxu0 0.0
    %346 = vmatpush1.xpose.msra.mxu0 0.0
    %347 = vmatprep.subr.mxu0 0.0
    %348 = vmatpush1.xpose.msra.mxu0 0.0
    %349 = vmatprep.subr.mxu0 0.0
    %350 = vmatpush1.xpose.msra.mxu0 0.0
    %351 = vmatprep.subr.mxu0 0.0
    %352 = vmatpush1.xpose.msra.mxu0 0.0
    %353 = vmatprep.subr.mxu0 0.0
    %354 = vmatpush1.xpose.msra.mxu0 0.0
    %355 = vmatprep.subr.mxu0 0.0
    %356 = vmatpush1.xpose.msra.mxu0 0.0
    %357 = vmatprep.subr.mxu0 0.0
    %358 = vmatpush1.xpose.msra.mxu0 0.0
    %359 = vmatprep.subr.mxu0 0.0
    %360 = vmatpush1.xpose.msra.mxu0 0.0
    %361 = vmatprep.subr.mxu0 0.0
    %362 = vmatpush1.xpose.msra.mxu0 0.0
    %363 = vmatprep.subr.mxu0 0.0
    %364 = vmatpush1.xpose.msra.mxu0 0.0
    %365 = vmatprep.mubr.f32.mxu0 0.0
    %366 = vmatmul.mubr.f32.gmra.mrb[0].mxu0 %v296
    %v367 = vpop.f32.mrb[0].mxu0
    %v368 = vadd.f32 0.0, %v367
    %v369 = vpop.f32.mrb[0].mxu0
    %370 = vdwg.mxu0
    %v371 = vadd.f32 %v66, %v295
    %v372 = vmax.f32 %v371, 0.0
    %s373 = smul.u32 %s198, 8
    %s374 = scalar_lea.vmem %s14, %s373
    %vm375 = vcmask 64512
    %376 = vst.msk [vmem:[%s374] sm:$0xff] %vm375, %v372
    %v377 = vlaneseq
    %v378 = vshrl.u32 %v377, 7
    %v379 = vsub.s32 0, %v378
    %v380 = vrot.slane %v368, %v379
    %v381 = vadd.f32 %v65, %v380
    %v382 = vmax.f32 %v381, 0.0
    %v383 = vsel %vm375, %v382, -inf
    %v384 = vrot.slane %v383, 4
    %v385 = vmax.f32 %v383, %v384
    %v386 = vrot.slane %v385, 2
    %v387 = vmax.f32 %v385, %v386
    %v388 = vrot.slane %v387, 1
    %v389 = vmax.f32 %v387, %v388
    %v390 = vsub.f32 %v382, %v389
    %v391 = vmul.f32 %v390, 1.442695
    %v392 = vpow.pop %v391
    %v393 = vsel %vm375, %v392, 0.0
    %v394 = vrot.slane %v393, 4
    %v395 = vadd.f32 %v393, %v394
    %v396 = vrot.slane %v395, 2
    %v397 = vadd.f32 %v395, %v396
    %v398 = vrot.slane %v397, 1
    %v399 = vadd.f32 %v397, %v398
    %v400 = vrcp.pop %v399
    %v401 = vmul.f32 %v392, %v400
    %v402 = vsel %vm375, %v372, -inf
    %403 = vmax.xlane.f32.xlu0 %v402
    %v404 = vpop.xlane.xlu0 %403
    %vm405 = vcmp.ge.f32.partialorder %v372, %v404
    %v406 = vsel %vm405, %v193, 8.0
    %v407 = vsel %vm375, %v406, inf
    %408 = vmin.xlane.f32.xlu0 %v407
    %v409 = vpop.xlane.xlu0 %408
    %v410 = vcvt.f32.s32.to.zero.pseudo %v409
    %s411 = scalar_lea.vmem %s15, %s373
    %vm412 = vcmask 7168
    %413 = vst.msk [vmem:[%s411] sm:$0xff] %vm412, %v410
    %v414 = vlaneseq
    %v415 = vshrl.u32 %v414, 7
    %v416 = vsub.s32 0, %v415
    %v417 = vrot.slane %v401, %v416
    %419 = vbcast.lane.b32.xlu0 %v417, 256
    %v420 = vpop.permute.xlu0 %419
    %v421 = vlaneseq
    %v422 = vshrl.u32 %v421, 7
    %v423 = vsub.s32 1, %v422
    %v424 = vrot.slane %v401, %v423
    %426 = vbcast.lane.b32.xlu0 %v424, 256
    %v427 = vpop.permute.xlu0 %426
    %v428 = vlaneseq
    %v429 = vshrl.u32 %v428, 7
    %v430 = vsub.s32 2, %v429
    %v431 = vrot.slane %v401, %v430
    %433 = vbcast.lane.b32.xlu0 %v431, 256
    %v434 = vpop.permute.xlu0 %433
    %v435 = vlaneseq
    %v436 = vshrl.u32 %v435, 7
    %v437 = vsub.s32 3, %v436
    %v438 = vrot.slane %v401, %v437
    %440 = vbcast.lane.b32.xlu0 %v438, 256
    %v441 = vpop.permute.xlu0 %440
    %v442 = vlaneseq
    %v443 = vshrl.u32 %v442, 7
    %v444 = vsub.s32 4, %v443
    %v445 = vrot.slane %v401, %v444
    %447 = vbcast.lane.b32.xlu0 %v445, 256
    %v448 = vpop.permute.xlu0 %447
    %v449 = vlaneseq
    %v450 = vshrl.u32 %v449, 7
    %v451 = vsub.s32 5, %v450
    %v452 = vrot.slane %v401, %v451
    %454 = vbcast.lane.b32.xlu0 %v452, 256
    %v455 = vpop.permute.xlu0 %454
    %v456 = vlaneseq
    %v457 = vshrl.u32 %v456, 7
    %v458 = vsub.s32 6, %v457
    %v459 = vrot.slane %v401, %v458
    %461 = vbcast.lane.b32.xlu0 %v459, 256
    %v462 = vpop.permute.xlu0 %461
    %v463 = vlaneseq
    %v464 = vshrl.u32 %v463, 7
    %v465 = vsub.s32 7, %v464
    %v466 = vrot.slane %v401, %v465
    %468 = vbcast.lane.b32.xlu0 %v466, 256
    %v469 = vpop.permute.xlu0 %468
    %v470 = vmul.f32 %v420, %v49
    %v471 = vmul.f32 %v427, %v50
    %v472 = vmul.f32 %v434, %v51
    %v473 = vmul.f32 %v441, %v52
    %v474 = vmul.f32 %v448, %v53
    %v475 = vmul.f32 %v455, %v54
    %v476 = vmul.f32 %v462, %v55
    %v477 = vmul.f32 %v469, %v56
    %v478 = vsel %vm212, %v470, 0.0
    %v479 = vsel %vm212, %v471, 0.0
    %v480 = vadd.f32 %v478, %v479
    %v481 = vsel %vm212, %v472, 0.0
    %v482 = vadd.f32 %v480, %v481
    %v483 = vsel %vm212, %v473, 0.0
    %v484 = vadd.f32 %v482, %v483
    %v485 = vsel %vm212, %v474, 0.0
    %v486 = vadd.f32 %v484, %v485
    %v487 = vsel %vm212, %v475, 0.0
    %v488 = vadd.f32 %v486, %v487
    %v489 = vsel %vm212, %v476, 0.0
    %v490 = vadd.f32 %v488, %v489
    %v491 = vsel %vm212, %v477, 0.0
    %v492 = vadd.f32 %v490, %v491
    %v493 = vmul.f32 %v420, %v57
    %v494 = vmul.f32 %v427, %v58
    %v495 = vmul.f32 %v434, %v59
    %v496 = vmul.f32 %v441, %v60
    %v497 = vmul.f32 %v448, %v61
    %v498 = vmul.f32 %v455, %v62
    %v499 = vmul.f32 %v462, %v63
    %v500 = vmul.f32 %v469, %v64
    %v501 = vsel %vm212, %v493, 0.0
    %v502 = vsel %vm212, %v494, 0.0
    %v503 = vadd.f32 %v501, %v502
    %v504 = vsel %vm212, %v495, 0.0
    %v505 = vadd.f32 %v503, %v504
    %v506 = vsel %vm212, %v496, 0.0
    %v507 = vadd.f32 %v505, %v506
    %v508 = vsel %vm212, %v497, 0.0
    %v509 = vadd.f32 %v507, %v508
    %v510 = vsel %vm212, %v498, 0.0
    %v511 = vadd.f32 %v509, %v510
    %v512 = vsel %vm212, %v499, 0.0
    %v513 = vadd.f32 %v511, %v512
    %v514 = vsel %vm212, %v500, 0.0
    %v515 = vadd.f32 %v513, %v514
    %v517 = vsel %vm212, %v515, 0
    %519 = vmatprep.subr.mxu0 0.0
    %520 = vmatpush1.msra.mxu0 %v76
    %521 = vmatprep.subr.mxu0 0.0
    %522 = vmatpush1.msra.mxu0 %v77
    %523 = vmatprep.subr.mxu0 0.0
    %524 = vmatpush1.msra.mxu0 %v78
    %525 = vmatprep.subr.mxu0 0.0
    %526 = vmatpush1.msra.mxu0 %v79
    %527 = vmatprep.subr.mxu0 0.0
    %528 = vmatpush1.msra.mxu0 0.0
    %529 = vmatprep.subr.mxu0 0.0
    %530 = vmatpush1.msra.mxu0 0.0
    %531 = vmatprep.subr.mxu0 0.0
    %532 = vmatpush1.msra.mxu0 0.0
    %533 = vmatprep.subr.mxu0 0.0
    %534 = vmatpush1.msra.mxu0 0.0
    %535 = vmatprep.subr.mxu0 0.0
    %536 = vmatpush1.msra.mxu0 0.0
    %537 = vmatprep.subr.mxu0 0.0
    %538 = vmatpush1.msra.mxu0 0.0
    %539 = vmatprep.subr.mxu0 0.0
    %540 = vmatpush1.msra.mxu0 0.0
    %541 = vmatprep.subr.mxu0 0.0
    %542 = vmatpush1.msra.mxu0 0.0
    %543 = vmatprep.subr.mxu0 0.0
    %544 = vmatpush1.msra.mxu0 0.0
    %545 = vmatprep.subr.mxu0 0.0
    %546 = vmatpush1.msra.mxu0 0.0
    %547 = vmatprep.subr.mxu0 0.0
    %548 = vmatpush1.msra.mxu0 0.0
    %549 = vmatprep.subr.mxu0 0.0
    %550 = vmatpush1.msra.mxu0 0.0
    %551 = vmatprep.subr.mxu0 0.0
    %552 = vmatpush1.msra.mxu0 0.0
    %553 = vmatprep.subr.mxu0 0.0
    %554 = vmatpush1.msra.mxu0 0.0
    %555 = vmatprep.subr.mxu0 0.0
    %556 = vmatpush1.msra.mxu0 0.0
    %557 = vmatprep.subr.mxu0 0.0
    %558 = vmatpush1.msra.mxu0 0.0
    %559 = vmatprep.subr.mxu0 0.0
    %560 = vmatpush1.msra.mxu0 0.0
    %561 = vmatprep.subr.mxu0 0.0
    %562 = vmatpush1.msra.mxu0 0.0
    %563 = vmatprep.subr.mxu0 0.0
    %564 = vmatpush1.msra.mxu0 0.0
    %565 = vmatprep.subr.mxu0 0.0
    %566 = vmatpush1.msra.mxu0 0.0
    %567 = vmatprep.subr.mxu0 0.0
    %568 = vmatpush1.msra.mxu0 0.0
    %569 = vmatprep.subr.mxu0 0.0
    %570 = vmatpush1.msra.mxu0 0.0
    %571 = vmatprep.subr.mxu0 0.0
    %572 = vmatpush1.msra.mxu0 0.0
    %573 = vmatprep.subr.mxu0 0.0
    %574 = vmatpush1.msra.mxu0 0.0
    %575 = vmatprep.subr.mxu0 0.0
    %576 = vmatpush1.msra.mxu0 0.0
    %577 = vmatprep.subr.mxu0 0.0
    %578 = vmatpush1.msra.mxu0 0.0
    %579 = vmatprep.subr.mxu0 0.0
    %580 = vmatpush1.msra.mxu0 0.0
    %581 = vmatprep.subr.mxu0 0.0
    %582 = vmatpush1.msra.mxu0 0.0
    %583 = vmatprep.mubr.f32.mxu0 0.0
    %584 = vmatmul.mubr.f32.gmra.mrb[0].mxu0 %v517
    %v585 = vpop.f32.mrb[0].mxu0
    %v586 = vadd.f32 0.0, %v585
    %v587 = vpop.f32.mrb[0].mxu0
    %588 = vdwg.mxu0
    %v590 = vsel %vm212, %v492, 0
    %592 = vmatprep.subr.mxu0 0.0
    %593 = vmatpush1.msra.mxu0 %v72
    %594 = vmatprep.subr.mxu0 0.0
    %595 = vmatpush1.msra.mxu0 %v73
    %596 = vmatprep.subr.mxu0 0.0
    %597 = vmatpush1.msra.mxu0 %v74
    %598 = vmatprep.subr.mxu0 0.0
    %599 = vmatpush1.msra.mxu0 %v75
    %600 = vmatprep.subr.mxu0 0.0
    %601 = vmatpush1.msra.mxu0 0.0
    %602 = vmatprep.subr.mxu0 0.0
    %603 = vmatpush1.msra.mxu0 0.0
    %604 = vmatprep.subr.mxu0 0.0
    %605 = vmatpush1.msra.mxu0 0.0
    %606 = vmatprep.subr.mxu0 0.0
    %607 = vmatpush1.msra.mxu0 0.0
    %608 = vmatprep.subr.mxu0 0.0
    %609 = vmatpush1.msra.mxu0 0.0
    %610 = vmatprep.subr.mxu0 0.0
    %611 = vmatpush1.msra.mxu0 0.0
    %612 = vmatprep.subr.mxu0 0.0
    %613 = vmatpush1.msra.mxu0 0.0
    %614 = vmatprep.subr.mxu0 0.0
    %615 = vmatpush1.msra.mxu0 0.0
    %616 = vmatprep.subr.mxu0 0.0
    %617 = vmatpush1.msra.mxu0 0.0
    %618 = vmatprep.subr.mxu0 0.0
    %619 = vmatpush1.msra.mxu0 0.0
    %620 = vmatprep.subr.mxu0 0.0
    %621 = vmatpush1.msra.mxu0 0.0
    %622 = vmatprep.subr.mxu0 0.0
    %623 = vmatpush1.msra.mxu0 0.0
    %624 = vmatprep.subr.mxu0 0.0
    %625 = vmatpush1.msra.mxu0 0.0
    %626 = vmatprep.subr.mxu0 0.0
    %627 = vmatpush1.msra.mxu0 0.0
    %628 = vmatprep.subr.mxu0 0.0
    %629 = vmatpush1.msra.mxu0 0.0
    %630 = vmatprep.subr.mxu0 0.0
    %631 = vmatpush1.msra.mxu0 0.0
    %632 = vmatprep.subr.mxu0 0.0
    %633 = vmatpush1.msra.mxu0 0.0
    %634 = vmatprep.subr.mxu0 0.0
    %635 = vmatpush1.msra.mxu0 0.0
    %636 = vmatprep.subr.mxu0 0.0
    %637 = vmatpush1.msra.mxu0 0.0
    %638 = vmatprep.subr.mxu0 0.0
    %639 = vmatpush1.msra.mxu0 0.0
    %640 = vmatprep.subr.mxu0 0.0
    %641 = vmatpush1.msra.mxu0 0.0
    %642 = vmatprep.subr.mxu0 0.0
    %643 = vmatpush1.msra.mxu0 0.0
    %644 = vmatprep.subr.mxu0 0.0
    %645 = vmatpush1.msra.mxu0 0.0
    %646 = vmatprep.subr.mxu0 0.0
    %647 = vmatpush1.msra.mxu0 0.0
    %648 = vmatprep.subr.mxu0 0.0
    %649 = vmatpush1.msra.mxu0 0.0
    %650 = vmatprep.subr.mxu0 0.0
    %651 = vmatpush1.msra.mxu0 0.0
    %652 = vmatprep.subr.mxu0 0.0
    %653 = vmatpush1.msra.mxu0 0.0
    %654 = vmatprep.subr.mxu0 0.0
    %655 = vmatpush1.msra.mxu0 0.0
    %656 = vmatprep.mubr.f32.mxu0 0.0
    %657 = vmatmul.mubr.f32.gmra.mrb[0].mxu0 %v590
    %v658 = vpop.f32.mrb[0].mxu0
    %v659 = vadd.f32 %v586, %v658
    %v660 = vpop.f32.mrb[0].mxu0
    %661 = vdwg.mxu0
    %662 = vmatprep.subr.mxu0 0.0
    %663 = vmatpush1.msra.mxu0 %v68
    %664 = vmatprep.subr.mxu0 0.0
    %665 = vmatpush1.msra.mxu0 %v69
    %666 = vmatprep.subr.mxu0 0.0
    %667 = vmatpush1.msra.mxu0 %v70
    %668 = vmatprep.subr.mxu0 0.0
    %669 = vmatpush1.msra.mxu0 %v71
    %670 = vmatprep.subr.mxu0 0.0
    %671 = vmatpush1.msra.mxu0 0.0
    %672 = vmatprep.subr.mxu0 0.0
    %673 = vmatpush1.msra.mxu0 0.0
    %674 = vmatprep.subr.mxu0 0.0
    %675 = vmatpush1.msra.mxu0 0.0
    %676 = vmatprep.subr.mxu0 0.0
    %677 = vmatpush1.msra.mxu0 0.0
    %678 = vmatprep.subr.mxu0 0.0
    %679 = vmatpush1.msra.mxu0 0.0
    %680 = vmatprep.subr.mxu0 0.0
    %681 = vmatpush1.msra.mxu0 0.0
    %682 = vmatprep.subr.mxu0 0.0
    %683 = vmatpush1.msra.mxu0 0.0
    %684 = vmatprep.subr.mxu0 0.0
    %685 = vmatpush1.msra.mxu0 0.0
    %686 = vmatprep.subr.mxu0 0.0
    %687 = vmatpush1.msra.mxu0 0.0
    %688 = vmatprep.subr.mxu0 0.0
    %689 = vmatpush1.msra.mxu0 0.0
    %690 = vmatprep.subr.mxu0 0.0
    %691 = vmatpush1.msra.mxu0 0.0
    %692 = vmatprep.subr.mxu0 0.0
    %693 = vmatpush1.msra.mxu0 0.0
    %694 = vmatprep.subr.mxu0 0.0
    %695 = vmatpush1.msra.mxu0 0.0
    %696 = vmatprep.subr.mxu0 0.0
    %697 = vmatpush1.msra.mxu0 0.0
    %698 = vmatprep.subr.mxu0 0.0
    %699 = vmatpush1.msra.mxu0 0.0
    %700 = vmatprep.subr.mxu0 0.0
    %701 = vmatpush1.msra.mxu0 0.0
    %702 = vmatprep.subr.mxu0 0.0
    %703 = vmatpush1.msra.mxu0 0.0
    %704 = vmatprep.subr.mxu0 0.0
    %705 = vmatpush1.msra.mxu0 0.0
    %706 = vmatprep.subr.mxu0 0.0
    %707 = vmatpush1.msra.mxu0 0.0
    %708 = vmatprep.subr.mxu0 0.0
    %709 = vmatpush1.msra.mxu0 0.0
    %710 = vmatprep.subr.mxu0 0.0
    %711 = vmatpush1.msra.mxu0 0.0
    %712 = vmatprep.subr.mxu0 0.0
    %713 = vmatpush1.msra.mxu0 0.0
    %714 = vmatprep.subr.mxu0 0.0
    %715 = vmatpush1.msra.mxu0 0.0
    %716 = vmatprep.subr.mxu0 0.0
    %717 = vmatpush1.msra.mxu0 0.0
    %718 = vmatprep.subr.mxu0 0.0
    %719 = vmatpush1.msra.mxu0 0.0
    %720 = vmatprep.subr.mxu0 0.0
    %721 = vmatpush1.msra.mxu0 0.0
    %722 = vmatprep.subr.mxu0 0.0
    %723 = vmatpush1.msra.mxu0 0.0
    %724 = vmatprep.subr.mxu0 0.0
    %725 = vmatpush1.msra.mxu0 0.0
    %726 = vmatprep.mubr.f32.mxu0 0.0
    %727 = vmatmul.mubr.f32.gmra.mrb[0].mxu0 %v299
    %v728 = vpop.f32.mrb[0].mxu0
    %v729 = vadd.f32 0.0, %v728
    %v730 = vpop.f32.mrb[0].mxu0
    %731 = vdwg.mxu0
    %v732 = vadd.f32 %v659, %v729
    %v733 = vadd.f32 %v732, %v283
    %v734 = vadd.f32 %v733, %v189
    %v735 = vxor.u32 %v734, 2147483648
    %v736 = vmul.f32 %v735, 1.442695
    %v737 = vpow.pop %v736
    %v738 = vadd.f32 %v737, 1.0
    %v739 = vrcp.pop %v738
    %v740 = vmul.f32 1.0, %v739
    %v741 = vtanh.pop %v734
    %743 = vrot.lane.b32.xlu0 %v205, 32
    %v744 = vpop.permute.xlu0 %743
    %v746 = vmul.f32 %v740, %v744
    %748 = vrot.lane.b32.xlu0 %v741, 64
    %v749 = vpop.permute.xlu0 %748
    %v751 = vmul.f32 %v740, %v749
    %753 = vrot.lane.b32.xlu0 %v751, 32
    %v754 = vpop.permute.xlu0 %753
    %v756 = vadd.f32 %v746, %v754
    %v757 = vtanh.pop %v756
    %759 = vrot.lane.b32.xlu0 %v757, 64
    %v760 = vpop.permute.xlu0 %759
    %v762 = vmul.f32 %v740, %v760
    %s763 = sadd.s32 %s198, 1
    %s764 = smul.u32 %s763, 8
    %s765 = scalar_lea.vmem %s0, %s764
    %v766 = vld [vmem:[%s765] sm:$0xff]
    %vm767 = vcmp.ge.s32.totalorder %v766, 0
    %v768 = vsel %vm767, %v766, %v410
    %770 = vrot.lane.b32.xlu0 %v762, 32
    %v771 = vpop.permute.xlu0 %770
    %774 = vrot.lane.b32.xlu0 %v756, 96
    %v775 = vpop.permute.xlu0 %774
  $region62: #{seq2seq_forward.3} parent=0 // loop_footer
    %s202 = sadd.s32 1, %s198
  $region63: #{seq2seq_forward.3} parent=0 // loop_footer_branch
    %197 = sbr.rel target = $region59
  $region64: #{seq2seq_forward.3} parent=0 // loop_exit
    _
  // Predicated region
  $region65: #{seq2seq_forward.3} parent=0 // pred_check
    _
  $region66: #{seq2seq_forward.3} parent=0 // pred_check_branch
    %778 = sbr.rel (0) target = $region68
  $region67: #{seq2seq_forward.3} parent=0 // pred_region
    _
  $region68: #{seq2seq_forward.3} parent=0 // pred_fallthru
    _
  // Predicated region
  $region69: #{seq2seq_forward.3} parent=0 // pred_check
    _
  $region70: #{seq2seq_forward.3} parent=0 // pred_check_branch
    %780 = sbr.rel (0) target = $region72
  $region71: #{seq2seq_forward.3} parent=0 // pred_region
    _
  $region72: #{seq2seq_forward.3} parent=0 // pred_fallthru
    _
  // Predicated region
  $region73: #{seq2seq_forward.3} parent=0 // pred_check
    _
  $region74: #{seq2seq_forward.3} parent=0 // pred_check_branch
    %782 = sbr.rel (0) target = $region76
  $region75: #{seq2seq_forward.3} parent=0 // pred_region
    _
  $region76: #{seq2seq_forward.3} parent=0 // pred_fallthru
    _
  // Predicated region
  $region77: #{seq2seq_forward.3} parent=0 // pred_check
    _
  $region78: #{seq2seq_forward.3} parent=0 // pred_check_branch
    %784 = sbr.rel (0) target = $region80
  $region79: #{seq2seq_forward.3} parent=0 // pred_region
    _
  $region80: #{seq2seq_forward.3} parent=0 // pred_fallthru
    _

// kernel: seq2seq_forward.2
$region0: #{seq2seq_forward.2}
  #allocation0 [shape = 'u32[]', space=smem, size = 0x4, offset = 0x4, fixed_abs, tag = 'smem constant byte address 0x4 - core index']
  #allocation1 [shape = 'u32[144,128]{1,0:T(1,128)}', space=vmem, size = 0x12000, scoped, tag = 'internal scratch']
  #allocation2 [shape = 'f32[64,128]{1,0:T(8,128)}', space=vmem, size = 0x8000, scoped, tag = 'scratch operand']
  #allocation3 [shape = 'f32[64,128]{1,0:T(8,128)}', space=vmem, size = 0x8000, scoped, tag = 'scratch operand']
  %s0 = inlined_call_operand.vmem [shape: f32[64,16], index: 0, kind: input, shape index: {}]
  %s1 = inlined_call_operand.vmem [shape: f32[16,128], index: 1, kind: input, shape index: {}]
  %s2 = inlined_call_operand.vmem [shape: f32[32,128], index: 2, kind: input, shape index: {}]
  %s3 = inlined_call_operand.vmem [shape: f32[1,128], index: 3, kind: input, shape index: {}]
  %s4 = inlined_call_operand.vmem [shape: f32[16,128], index: 4, kind: input, shape index: {}]
  %s5 = inlined_call_operand.vmem [shape: f32[32,128], index: 5, kind: input, shape index: {}]
  %s6 = inlined_call_operand.vmem [shape: f32[1,128], index: 6, kind: input, shape index: {}]
  %s7 = inlined_call_operand.vmem [shape: f32[32,32], index: 7, kind: input, shape index: {}]
  %s8 = inlined_call_operand.vmem [shape: f32[32,32], index: 8, kind: input, shape index: {}]
  %s9 = inlined_call_operand.vmem [shape: f32[1,32], index: 9, kind: input, shape index: {}]
  %s10 = inlined_call_operand.vmem [shape: f32[32,32], index: 10, kind: input, shape index: {}]
  %s11 = inlined_call_operand.vmem [shape: f32[32,32], index: 11, kind: input, shape index: {}]
  %s12 = inlined_call_operand.vmem [shape: f32[1,32], index: 12, kind: input, shape index: {}]
  %s13 = inlined_call_operand.vmem [shape: f32[8,8,32], index: 13, kind: output, shape index: {0}]
  %s14 = inlined_call_operand.vmem [shape: f32[8,8,32], index: 14, kind: output, shape index: {1}]
  %s15 = inlined_call_operand.vmem [shape: f32[8,32], index: 15, kind: output, shape index: {2}]
  %s16 = inlined_call_operand.vmem [shape: f32[8,32], index: 16, kind: output, shape index: {3}]
  %17 = xla_tuple %s13, %s14, %s15, %s16
  %s18 = sld [smem:[#allocation0]]
  $region93: #{seq2seq_forward.2} parent=0
    _
  %s20 = ssub.s32 1, %s18
  %s21 = scalar_select 0, %s20, %s18
  // Predicated region
  $region2: #{seq2seq_forward.2} parent=0 // pred_check
    _
  $region3: #{seq2seq_forward.2} parent=0 // pred_check_branch
    %23 = sbr.rel (0) target = $region5
  $region4: #{seq2seq_forward.2} parent=0 // pred_region
    _
  $region5: #{seq2seq_forward.2} parent=0 // pred_fallthru
    _
  // Predicated region
  $region6: #{seq2seq_forward.2} parent=0 // pred_check
    _
  $region7: #{seq2seq_forward.2} parent=0 // pred_check_branch
    %25 = sbr.rel (0) target = $region9
  $region8: #{seq2seq_forward.2} parent=0 // pred_region
    _
  $region9: #{seq2seq_forward.2} parent=0 // pred_fallthru
    _
  // Predicated region
  $region10: #{seq2seq_forward.2} parent=0 // pred_check
    _
  $region11: #{seq2seq_forward.2} parent=0 // pred_check_branch
    %27 = sbr.rel (0) target = $region13
  $region12: #{seq2seq_forward.2} parent=0 // pred_region
    _
  $region13: #{seq2seq_forward.2} parent=0 // pred_fallthru
    _
  // Predicated region
  $region14: #{seq2seq_forward.2} parent=0 // pred_check
    _
  $region15: #{seq2seq_forward.2} parent=0 // pred_check_branch
    %29 = sbr.rel (0) target = $region17
  $region16: #{seq2seq_forward.2} parent=0 // pred_region
    _
  $region17: #{seq2seq_forward.2} parent=0 // pred_fallthru
    _
  // Predicated region
  $region18: #{seq2seq_forward.2} parent=0 // pred_check
    _
  $region19: #{seq2seq_forward.2} parent=0 // pred_check_branch
    %31 = sbr.rel (0) target = $region21
  $region20: #{seq2seq_forward.2} parent=0 // pred_region
    _
  $region21: #{seq2seq_forward.2} parent=0 // pred_fallthru
    _
  // Predicated region
  $region22: #{seq2seq_forward.2} parent=0 // pred_check
    _
  $region23: #{seq2seq_forward.2} parent=0 // pred_check_branch
    %33 = sbr.rel (0) target = $region25
  $region24: #{seq2seq_forward.2} parent=0 // pred_region
    _
  $region25: #{seq2seq_forward.2} parent=0 // pred_fallthru
    _
  // Predicated region
  $region26: #{seq2seq_forward.2} parent=0 // pred_check
    _
  $region27: #{seq2seq_forward.2} parent=0 // pred_check_branch
    %35 = sbr.rel (0) target = $region29
  $region28: #{seq2seq_forward.2} parent=0 // pred_region
    _
  $region29: #{seq2seq_forward.2} parent=0 // pred_fallthru
    _
  // Predicated region
  $region30: #{seq2seq_forward.2} parent=0 // pred_check
    _
  $region31: #{seq2seq_forward.2} parent=0 // pred_check_branch
    %37 = sbr.rel (0) target = $region33
  $region32: #{seq2seq_forward.2} parent=0 // pred_region
    _
  $region33: #{seq2seq_forward.2} parent=0 // pred_fallthru
    _
  // Predicated region
  $region34: #{seq2seq_forward.2} parent=0 // pred_check
    _
  $region35: #{seq2seq_forward.2} parent=0 // pred_check_branch
    %39 = sbr.rel (0) target = $region37
  $region36: #{seq2seq_forward.2} parent=0 // pred_region
    _
  $region37: #{seq2seq_forward.2} parent=0 // pred_fallthru
    _
  // Predicated region
  $region38: #{seq2seq_forward.2} parent=0 // pred_check
    _
  $region39: #{seq2seq_forward.2} parent=0 // pred_check_branch
    %41 = sbr.rel (0) target = $region41
  $region40: #{seq2seq_forward.2} parent=0 // pred_region
    _
  $region41: #{seq2seq_forward.2} parent=0 // pred_fallthru
    _
  // Predicated region
  $region42: #{seq2seq_forward.2} parent=0 // pred_check
    _
  $region43: #{seq2seq_forward.2} parent=0 // pred_check_branch
    %43 = sbr.rel (0) target = $region45
  $region44: #{seq2seq_forward.2} parent=0 // pred_region
    _
  $region45: #{seq2seq_forward.2} parent=0 // pred_fallthru
    _
  // Predicated region
  $region46: #{seq2seq_forward.2} parent=0 // pred_check
    _
  $region47: #{seq2seq_forward.2} parent=0 // pred_check_branch
    %45 = sbr.rel (0) target = $region49
  $region48: #{seq2seq_forward.2} parent=0 // pred_region
    _
  $region49: #{seq2seq_forward.2} parent=0 // pred_fallthru
    _
  // Predicated region
  $region50: #{seq2seq_forward.2} parent=0 // pred_check
    _
  $region51: #{seq2seq_forward.2} parent=0 // pred_check_branch
    %47 = sbr.rel (0) target = $region53
  $region52: #{seq2seq_forward.2} parent=0 // pred_region
    _
  $region53: #{seq2seq_forward.2} parent=0 // pred_fallthru
    _
  %v48 = vld [vmem:[%s0] sm:$0xff]
  %v49 = vld [vmem:[%s0 + $0x8] sm:$0xff]
  %v50 = vld [vmem:[%s0 + $0x10] sm:$0xff]
  %v51 = vld [vmem:[%s0 + $0x18] sm:$0xff]
  %v52 = vld [vmem:[%s0 + $0x20] sm:$0xff]
  %v53 = vld [vmem:[%s0 + $0x28] sm:$0xff]
  %v54 = vld [vmem:[%s0 + $0x30] sm:$0xff]
  %v55 = vld [vmem:[%s0 + $0x38] sm:$0xff]
  %v56 = vld [vmem:[%s1] sm:$0xff]
  %v57 = vld [vmem:[%s1 + $0x8] sm:$0xff]
  %v58 = vld [vmem:[%s3] sm:$0x1]
  %v60 = vlaneseq
  %v61 = vshrl.u32 %v60, 7
  %v62 = vsub.s32 0, %v61
  %v63 = vrot.slane %v58, %v62
  %vm65 = vcmask 130048
  %v67 = vsel %vm65, %v48, 0
  %v70 = vsel %vm65, %v49, 0
  %v73 = vsel %vm65, %v50, 0
  %v76 = vsel %vm65, %v51, 0
  %v79 = vsel %vm65, %v52, 0
  %v82 = vsel %vm65, %v53, 0
  %v85 = vsel %vm65, %v54, 0
  %v88 = vsel %vm65, %v55, 0
  %90 = vmatprep.subr.mxu0 0.0
  %91 = vmatpush1.msra.mxu0 %v56
  %92 = vmatprep.subr.mxu0 0.0
  %93 = vmatpush1.msra.mxu0 %v57
  %94 = vmatprep.subr.mxu0 0.0
  %95 = vmatpush1.msra.mxu0 0.0
  %96 = vmatprep.subr.mxu0 0.0
  %97 = vmatpush1.msra.mxu0 0.0
  %98 = vmatprep.subr.mxu0 0.0
  %99 = vmatpush1.msra.mxu0 0.0
  %100 = vmatprep.subr.mxu0 0.0
  %101 = vmatpush1.msra.mxu0 0.0
  %102 = vmatprep.subr.mxu0 0.0
  %103 = vmatpush1.msra.mxu0 0.0
  %104 = vmatprep.subr.mxu0 0.0
  %105 = vmatpush1.msra.mxu0 0.0
  %106 = vmatprep.subr.mxu0 0.0
  %107 = vmatpush1.msra.mxu0 0.0
  %108 = vmatprep.subr.mxu0 0.0
  %109 = vmatpush1.msra.mxu0 0.0
  %110 = vmatprep.subr.mxu0 0.0
  %111 = vmatpush1.msra.mxu0 0.0
  %112 = vmatprep.subr.mxu0 0.0
  %113 = vmatpush1.msra.mxu0 0.0
  %114 = vmatprep.subr.mxu0 0.0
  %115 = vmatpush1.msra.mxu0 0.0
  %116 = vmatprep.subr.mxu0 0.0
  %117 = vmatpush1.msra.mxu0 0.0
  %118 = vmatprep.subr.mxu0 0.0
  %119 = vmatpush1.msra.mxu0 0.0
  %120 = vmatprep.subr.mxu0 0.0
  %121 = vmatpush1.msra.mxu0 0.0
  %122 = vmatprep.subr.mxu0 0.0
  %123 = vmatpush1.msra.mxu0 0.0
  %124 = vmatprep.subr.mxu0 0.0
  %125 = vmatpush1.msra.mxu0 0.0
  %126 = vmatprep.subr.mxu0 0.0
  %127 = vmatpush1.msra.mxu0 0.0
  %128 = vmatprep.subr.mxu0 0.0
  %129 = vmatpush1.msra.mxu0 0.0
  %130 = vmatprep.subr.mxu0 0.0
  %131 = vmatpush1.msra.mxu0 0.0
  %132 = vmatprep.subr.mxu0 0.0
  %133 = vmatpush1.msra.mxu0 0.0
  %134 = vmatprep.subr.mxu0 0.0
  %135 = vmatpush1.msra.mxu0 0.0
  %136 = vmatprep.subr.mxu0 0.0
  %137 = vmatpush1.msra.mxu0 0.0
  %138 = vmatprep.subr.mxu0 0.0
  %139 = vmatpush1.msra.mxu0 0.0
  %140 = vmatprep.subr.mxu0 0.0
  %141 = vmatpush1.msra.mxu0 0.0
  %142 = vmatprep.subr.mxu0 0.0
  %143 = vmatpush1.msra.mxu0 0.0
  %144 = vmatprep.subr.mxu0 0.0
  %145 = vmatpush1.msra.mxu0 0.0
  %146 = vmatprep.subr.mxu0 0.0
  %147 = vmatpush1.msra.mxu0 0.0
  %148 = vmatprep.subr.mxu0 0.0
  %149 = vmatpush1.msra.mxu0 0.0
  %150 = vmatprep.subr.mxu0 0.0
  %151 = vmatpush1.msra.mxu0 0.0
  %152 = vmatprep.subr.mxu0 0.0
  %153 = vmatpush1.msra.mxu0 0.0
  %154 = vmatprep.mubr.f32.mxu0 0.0
  %155 = vmatmul.mubr.f32.gmra.mrb[0].mxu0 %v67
  %v156 = vpop.f32.mrb[0].mxu0
  %v157 = vadd.f32 %v63, %v156
  %v158 = vpop.f32.mrb[0].mxu0
  %159 = vmatprep.mubr.f32.mxu0 0.0
  %160 = vmatmul.mubr.f32.gmra.mrb[0].mxu0 %v70
  %v161 = vpop.f32.mrb[0].mxu0
  %v162 = vadd.f32 %v63, %v161
  %v163 = vpop.f32.mrb[0].mxu0
  %164 = vmatprep.mubr.f32.mxu0 0.0
  %165 = vmatmul.mubr.f32.gmra.mrb[0].mxu0 %v73
  %v166 = vpop.f32.mrb[0].mxu0
  %v167 = vadd.f32 %v63, %v166
  %v168 = vpop.f32.mrb[0].mxu0
  %169 = vmatprep.mubr.f32.mxu0 0.0
  %170 = vmatmul.mubr.f32.gmra.mrb[0].mxu0 %v76
  %v171 = vpop.f32.mrb[0].mxu0
  %v172 = vadd.f32 %v63, %v171
  %v173 = vpop.f32.mrb[0].mxu0
  %174 = vmatprep.mubr.f32.mxu0 0.0
  %175 = vmatmul.mubr.f32.gmra.mrb[0].mxu0 %v79
  %v176 = vpop.f32.mrb[0].mxu0
  %v177 = vadd.f32 %v63, %v176
  %v178 = vpop.f32.mrb[0].mxu0
  %179 = vmatprep.mubr.f32.mxu0 0.0
  %180 = vmatmul.mubr.f32.gmra.mrb[0].mxu0 %v82
  %v181 = vpop.f32.mrb[0].mxu0
  %v182 = vadd.f32 %v63, %v181
  %v183 = vpop.f32.mrb[0].mxu0
  %184 = vmatprep.mubr.f32.mxu0 0.0
  %185 = vmatmul.mubr.f32.gmra.mrb[0].mxu0 %v85
  %v186 = vpop.f32.mrb[0].mxu0
  %v187 = vadd.f32 %v63, %v186
  %v188 = vpop.f32.mrb[0].mxu0
  %189 = vmatprep.mubr.f32.mxu0 0.0
  %190 = vmatmul.mubr.f32.gmra.mrb[0].mxu0 %v88
  %v191 = vpop.f32.mrb[0].mxu0
  %v192 = vadd.f32 %v63, %v191
  %v193 = vpop.f32.mrb[0].mxu0
  %194 = vdwg.mxu0
  %195 = vst [vmem:[#allocation2] sm:$0xff] %v157
  %196 = vst [vmem:[#allocation2 + $0x8] sm:$0xff] %v162
  %197 = vst [vmem:[#allocation2 + $0x10] sm:$0xff] %v167
  %198 = vst [vmem:[#allocation2 + $0x18] sm:$0xff] %v172
  %199 = vst [vmem:[#allocation2 + $0x20] sm:$0xff] %v177
  %200 = vst [vmem:[#allocation2 + $0x28] sm:$0xff] %v182
  %201 = vst [vmem:[#allocation2 + $0x30] sm:$0xff] %v187
  %202 = vst [vmem:[#allocation2 + $0x38] sm:$0xff] %v192
  %v203 = vld [vmem:[%s4] sm:$0xff]
  %v204 = vld [vmem:[%s4 + $0x8] sm:$0xff]
  %v205 = vld [vmem:[%s6] sm:$0x1]
  %v207 = vlaneseq
  %v208 = vshrl.u32 %v207, 7
  %v209 = vsub.s32 0, %v208
  %v210 = vrot.slane %v205, %v209
  %212 = vmatprep.subr.mxu0 0.0
  %213 = vmatpush1.msra.mxu0 %v203
  %214 = vmatprep.subr.mxu0 0.0
  %215 = vmatpush1.msra.mxu0 %v204
  %216 = vmatprep.subr.mxu0 0.0
  %217 = vmatpush1.msra.mxu0 0.0
  %218 = vmatprep.subr.mxu0 0.0
  %219 = vmatpush1.msra.mxu0 0.0
  %220 = vmatprep.subr.mxu0 0.0
  %221 = vmatpush1.msra.mxu0 0.0
  %222 = vmatprep.subr.mxu0 0.0
  %223 = vmatpush1.msra.mxu0 0.0
  %224 = vmatprep.subr.mxu0 0.0
  %225 = vmatpush1.msra.mxu0 0.0
  %226 = vmatprep.subr.mxu0 0.0
  %227 = vmatpush1.msra.mxu0 0.0
  %228 = vmatprep.subr.mxu0 0.0
  %229 = vmatpush1.msra.mxu0 0.0
  %230 = vmatprep.subr.mxu0 0.0
  %231 = vmatpush1.msra.mxu0 0.0
  %232 = vmatprep.subr.mxu0 0.0
  %233 = vmatpush1.msra.mxu0 0.0
  %234 = vmatprep.subr.mxu0 0.0
  %235 = vmatpush1.msra.mxu0 0.0
  %236 = vmatprep.subr.mxu0 0.0
  %237 = vmatpush1.msra.mxu0 0.0
  %238 = vmatprep.subr.mxu0 0.0
  %239 = vmatpush1.msra.mxu0 0.0
  %240 = vmatprep.subr.mxu0 0.0
  %241 = vmatpush1.msra.mxu0 0.0
  %242 = vmatprep.subr.mxu0 0.0
  %243 = vmatpush1.msra.mxu0 0.0
  %244 = vmatprep.subr.mxu0 0.0
  %245 = vmatpush1.msra.mxu0 0.0
  %246 = vmatprep.subr.mxu0 0.0
  %247 = vmatpush1.msra.mxu0 0.0
  %248 = vmatprep.subr.mxu0 0.0
  %249 = vmatpush1.msra.mxu0 0.0
  %250 = vmatprep.subr.mxu0 0.0
  %251 = vmatpush1.msra.mxu0 0.0
  %252 = vmatprep.subr.mxu0 0.0
  %253 = vmatpush1.msra.mxu0 0.0
  %254 = vmatprep.subr.mxu0 0.0
  %255 = vmatpush1.msra.mxu0 0.0
  %256 = vmatprep.subr.mxu0 0.0
  %257 = vmatpush1.msra.mxu0 0.0
  %258 = vmatprep.subr.mxu0 0.0
  %259 = vmatpush1.msra.mxu0 0.0
  %260 = vmatprep.subr.mxu0 0.0
  %261 = vmatpush1.msra.mxu0 0.0
  %262 = vmatprep.subr.mxu0 0.0
  %263 = vmatpush1.msra.mxu0 0.0
  %264 = vmatprep.subr.mxu0 0.0
  %265 = vmatpush1.msra.mxu0 0.0
  %266 = vmatprep.subr.mxu0 0.0
  %267 = vmatpush1.msra.mxu0 0.0
  %268 = vmatprep.subr.mxu0 0.0
  %269 = vmatpush1.msra.mxu0 0.0
  %270 = vmatprep.subr.mxu0 0.0
  %271 = vmatpush1.msra.mxu0 0.0
  %272 = vmatprep.subr.mxu0 0.0
  %273 = vmatpush1.msra.mxu0 0.0
  %274 = vmatprep.subr.mxu0 0.0
  %275 = vmatpush1.msra.mxu0 0.0
  %276 = vmatprep.mubr.f32.mxu0 0.0
  %277 = vmatmul.mubr.f32.gmra.mrb[0].mxu0 %v67
  %v278 = vpop.f32.mrb[0].mxu0
  %v279 = vadd.f32 %v210, %v278
  %v280 = vpop.f32.mrb[0].mxu0
  %281 = vmatprep.mubr.f32.mxu0 0.0
  %282 = vmatmul.mubr.f32.gmra.mrb[0].mxu0 %v70
  %v283 = vpop.f32.mrb[0].mxu0
  %v284 = vadd.f32 %v210, %v283
  %v285 = vpop.f32.mrb[0].mxu0
  %286 = vmatprep.mubr.f32.mxu0 0.0
  %287 = vmatmul.mubr.f32.gmra.mrb[0].mxu0 %v73
  %v288 = vpop.f32.mrb[0].mxu0
  %v289 = vadd.f32 %v210, %v288
  %v290 = vpop.f32.mrb[0].mxu0
  %291 = vmatprep.mubr.f32.mxu0 0.0
  %292 = vmatmul.mubr.f32.gmra.mrb[0].mxu0 %v76
  %v293 = vpop.f32.mrb[0].mxu0
  %v294 = vadd.f32 %v210, %v293
  %v295 = vpop.f32.mrb[0].mxu0
  %296 = vmatprep.mubr.f32.mxu0 0.0
  %297 = vmatmul.mubr.f32.gmra.mrb[0].mxu0 %v79
  %v298 = vpop.f32.mrb[0].mxu0
  %v299 = vadd.f32 %v210, %v298
  %v300 = vpop.f32.mrb[0].mxu0
  %301 = vmatprep.mubr.f32.mxu0 0.0
  %302 = vmatmul.mubr.f32.gmra.mrb[0].mxu0 %v82
  %v303 = vpop.f32.mrb[0].mxu0
  %v304 = vadd.f32 %v210, %v303
  %v305 = vpop.f32.mrb[0].mxu0
  %306 = vmatprep.mubr.f32.mxu0 0.0
  %307 = vmatmul.mubr.f32.gmra.mrb[0].mxu0 %v85
  %v308 = vpop.f32.mrb[0].mxu0
  %v309 = vadd.f32 %v210, %v308
  %v310 = vpop.f32.mrb[0].mxu0
  %311 = vmatprep.mubr.f32.mxu0 0.0
  %312 = vmatmul.mubr.f32.gmra.mrb[0].mxu0 %v88
  %v313 = vpop.f32.mrb[0].mxu0
  %v314 = vadd.f32 %v210, %v313
  %v315 = vpop.f32.mrb[0].mxu0
  %316 = vdwg.mxu0
  %317 = vst [vmem:[#allocation3] sm:$0xff] %v279
  %318 = vst [vmem:[#allocation3 + $0x8] sm:$0xff] %v284
  %319 = vst [vmem:[#allocation3 + $0x10] sm:$0xff] %v289
  %320 = vst [vmem:[#allocation3 + $0x18] sm:$0xff] %v294
  %321 = vst [vmem:[#allocation3 + $0x20] sm:$0xff] %v299
  %322 = vst [vmem:[#allocation3 + $0x28] sm:$0xff] %v304
  %323 = vst [vmem:[#allocation3 + $0x30] sm:$0xff] %v309
  %324 = vst [vmem:[#allocation3 + $0x38] sm:$0xff] %v314
  %v325 = vld [vmem:[%s2] sm:$0xff]
  %v326 = vld [vmem:[%s2 + $0x8] sm:$0xff]
  %v327 = vld [vmem:[%s2 + $0x10] sm:$0xff]
  %v328 = vld [vmem:[%s2 + $0x18] sm:$0xff]
  %v329 = vld [vmem:[%s5] sm:$0xff]
  %v330 = vld [vmem:[%s5 + $0x8] sm:$0xff]
  %v331 = vld [vmem:[%s5 + $0x10] sm:$0xff]
  %v332 = vld [vmem:[%s5 + $0x18] sm:$0xff]
  loop: start=0, step=1, limit=8
  $region54: #{seq2seq_forward.2} parent=0 // loop_pre_header
    _
  $region55: #{seq2seq_forward.2} parent=0 // loop_header
    %s334 = sphi 0, %s338
    %p335 = scmp.ge.s32.totalorder %s334, 8
    %v339 = vphi 0.0, %v526
    %v340 = vphi 0.0, %v520
    %v341 = vphi 0.0, %v550
    %v342 = vphi 0.0, %v544
  $region56: #{seq2seq_forward.2} parent=0 // loop_header_branch
    %337 = sbr.rel (%p335) target = $region60
  $region57: #{seq2seq_forward.2} parent=0 // loop_body
    %s343 = ssub.s32 7, %s334
    %s344 = smul.u32 %s334, 8
    %s345 = smul.u32 %s343, 8
    %s346 = scalar_lea.vmem [#allocation2], %s344
    %v347 = vld [vmem:[%s346] sm:$0xff]
    %349 = vrot.lane.b32.xlu0 %v339, 32
    %v350 = vpop.permute.xlu0 %349
    %vm351 = vcmask 261120
    %v352 = vsel %vm351, %v350, 0
    %354 = vmatprep.subr.mxu0 0.0
    %355 = vmatpush1.msra.mxu0 %v325
    %356 = vmatprep.subr.mxu0 0.0
    %357 = vmatpush1.msra.mxu0 %v326
    %358 = vmatprep.subr.mxu0 0.0
    %359 = vmatpush1.msra.mxu0 %v327
    %360 = vmatprep.subr.mxu0 0.0
    %361 = vmatpush1.msra.mxu0 %v328
    %362 = vmatprep.subr.mxu0 0.0
    %363 = vmatpush1.msra.mxu0 0.0
    %364 = vmatprep.subr.mxu0 0.0
    %365 = vmatpush1.msra.mxu0 0.0
    %366 = vmatprep.subr.mxu0 0.0
    %367 = vmatpush1.msra.mxu0 0.0
    %368 = vmatprep.subr.mxu0 0.0
    %369 = vmatpush1.msra.mxu0 0.0
    %370 = vmatprep.subr.mxu0 0.0
    %371 = vmatpush1.msra.mxu0 0.0
    %372 = vmatprep.subr.mxu0 0.0
    %373 = vmatpush1.msra.mxu0 0.0
    %374 = vmatprep.subr.mxu0 0.0
    %375 = vmatpush1.msra.mxu0 0.0
    %376 = vmatprep.subr.mxu0 0.0
    %377 = vmatpush1.msra.mxu0 0.0
    %378 = vmatprep.subr.mxu0 0.0
    %379 = vmatpush1.msra.mxu0 0.0
    %380 = vmatprep.subr.mxu0 0.0
    %381 = vmatpush1.msra.mxu0 0.0
    %382 = vmatprep.subr.mxu0 0.0
    %383 = vmatpush1.msra.mxu0 0.0
    %384 = vmatprep.subr.mxu0 0.0
    %385 = vmatpush1.msra.mxu0 0.0
    %386 = vmatprep.subr.mxu0 0.0
    %387 = vmatpush1.msra.mxu0 0.0
    %388 = vmatprep.subr.mxu0 0.0
    %389 = vmatpush1.msra.mxu0 0.0
    %390 = vmatprep.subr.mxu0 0.0
    %391 = vmatpush1.msra.mxu0 0.0
    %392 = vmatprep.subr.mxu0 0.0
    %393 = vmatpush1.msra.mxu0 0.0
    %394 = vmatprep.subr.mxu0 0.0
    %395 = vmatpush1.msra.mxu0 0.0
    %396 = vmatprep.subr.mxu0 0.0
    %397 = vmatpush1.msra.mxu0 0.0
    %398 = vmatprep.subr.mxu0 0.0
    %399 = vmatpush1.msra.mxu0 0.0
    %400 = vmatprep.subr.mxu0 0.0
    %401 = vmatpush1.msra.mxu0 0.0
    %402 = vmatprep.subr.mxu0 0.0
    %403 = vmatpush1.msra.mxu0 0.0
    %404 = vmatprep.subr.mxu0 0.0
    %405 = vmatpush1.msra.mxu0 0.0
    %406 = vmatprep.subr.mxu0 0.0
    %407 = vmatpush1.msra.mxu0 0.0
    %408 = vmatprep.subr.mxu0 0.0
    %409 = vmatpush1.msra.mxu0 0.0
    %410 = vmatprep.subr.mxu0 0.0
    %411 = vmatpush1.msra.mxu0 0.0
    %412 = vmatprep.subr.mxu0 0.0
    %413 = vmatpush1.msra.mxu0 0.0
    %414 = vmatprep.subr.mxu0 0.0
    %415 = vmatpush1.msra.mxu0 0.0
    %416 = vmatprep.subr.mxu0 0.0
    %417 = vmatpush1.msra.mxu0 0.0
    %418 = vmatprep.mubr.f32.mxu0 0.0
    %419 = vmatmul.mubr.f32.gmra.mrb[0].mxu0 %v352
    %v420 = vpop.f32.mrb[0].mxu0
    %v421 = vadd.f32 0.0, %v420
    %v422 = vpop.f32.mrb[0].mxu0
    %423 = vdwg.mxu0
    %v424 = vadd.f32 %v347, %v421
    %s425 = scalar_lea.vmem [#allocation3], %s345
    %v426 = vld [vmem:[%s425] sm:$0xff]
    %428 = vrot.lane.b32.xlu0 %v341, 32
    %v429 = vpop.permute.xlu0 %428
    %v430 = vsel %vm351, %v429, 0
    %432 = vmatprep.subr.mxu0 0.0
    %433 = vmatpush1.msra.mxu0 %v329
    %434 = vmatprep.subr.mxu0 0.0
    %435 = vmatpush1.msra.mxu0 %v330
    %436 = vmatprep.subr.mxu0 0.0
    %437 = vmatpush1.msra.mxu0 %v331
    %438 = vmatprep.subr.mxu0 0.0
    %439 = vmatpush1.msra.mxu0 %v332
    %440 = vmatprep.subr.mxu0 0.0
    %441 = vmatpush1.msra.mxu0 0.0
    %442 = vmatprep.subr.mxu0 0.0
    %443 = vmatpush1.msra.mxu0 0.0
    %444 = vmatprep.subr.mxu0 0.0
    %445 = vmatpush1.msra.mxu0 0.0
    %446 = vmatprep.subr.mxu0 0.0
    %447 = vmatpush1.msra.mxu0 0.0
    %448 = vmatprep.subr.mxu0 0.0
    %449 = vmatpush1.msra.mxu0 0.0
    %450 = vmatprep.subr.mxu0 0.0
    %451 = vmatpush1.msra.mxu0 0.0
    %452 = vmatprep.subr.mxu0 0.0
    %453 = vmatpush1.msra.mxu0 0.0
    %454 = vmatprep.subr.mxu0 0.0
    %455 = vmatpush1.msra.mxu0 0.0
    %456 = vmatprep.subr.mxu0 0.0
    %457 = vmatpush1.msra.mxu0 0.0
    %458 = vmatprep.subr.mxu0 0.0
    %459 = vmatpush1.msra.mxu0 0.0
    %460 = vmatprep.subr.mxu0 0.0
    %461 = vmatpush1.msra.mxu0 0.0
    %462 = vmatprep.subr.mxu0 0.0
    %463 = vmatpush1.msra.mxu0 0.0
    %464 = vmatprep.subr.mxu0 0.0
    %465 = vmatpush1.msra.mxu0 0.0
    %466 = vmatprep.subr.mxu0 0.0
    %467 = vmatpush1.msra.mxu0 0.0
    %468 = vmatprep.subr.mxu0 0.0
    %469 = vmatpush1.msra.mxu0 0.0
    %470 = vmatprep.subr.mxu0 0.0
    %471 = vmatpush1.msra.mxu0 0.0
    %472 = vmatprep.subr.mxu0 0.0
    %473 = vmatpush1.msra.mxu0 0.0
    %474 = vmatprep.subr.mxu0 0.0
    %475 = vmatpush1.msra.mxu0 0.0
    %476 = vmatprep.subr.mxu0 0.0
    %477 = vmatpush1.msra.mxu0 0.0
    %478 = vmatprep.subr.mxu0 0.0
    %479 = vmatpush1.msra.mxu0 0.0
    %480 = vmatprep.subr.mxu0 0.0
    %481 = vmatpush1.msra.mxu0 0.0
    %482 = vmatprep.subr.mxu0 0.0
    %483 = vmatpush1.msra.mxu0 0.0
    %484 = vmatprep.subr.mxu0 0.0
    %485 = vmatpush1.msra.mxu0 0.0
    %486 = vmatprep.subr.mxu0 0.0
    %487 = vmatpush1.msra.mxu0 0.0
    %488 = vmatprep.subr.mxu0 0.0
    %489 = vmatpush1.msra.mxu0 0.0
    %490 = vmatprep.subr.mxu0 0.0
    %491 = vmatpush1.msra.mxu0 0.0
    %492 = vmatprep.subr.mxu0 0.0
    %493 = vmatpush1.msra.mxu0 0.0
    %494 = vmatprep.subr.mxu0 0.0
    %495 = vmatpush1.msra.mxu0 0.0
    %496 = vmatprep.mubr.f32.mxu0 0.0
    %497 = vmatmul.mubr.f32.gmra.mrb[0].mxu0 %v430
    %v498 = vpop.f32.mrb[0].mxu0
    %v499 = vadd.f32 0.0, %v498
    %v500 = vpop.f32.mrb[0].mxu0
    %501 = vdwg.mxu0
    %v502 = vadd.f32 %v426, %v499
    %v503 = vxor.u32 %v424, 2147483648
    %v504 = vmul.f32 %v503, 1.442695
    %v505 = vpow.pop %v504
    %v506 = vadd.f32 %v505, 1.0
    %v507 = vrcp.pop %v506
    %v508 = vmul.f32 1.0, %v507
    %v509 = vtanh.pop %v424
    %v510 = vmul.f32 %v508, %v340
    %512 = vrot.lane.b32.xlu0 %v509, 64
    %v513 = vpop.permute.xlu0 %512
    %v515 = vmul.f32 %v508, %v513
    %517 = vrot.lane.b32.xlu0 %v515, 32
    %v518 = vpop.permute.xlu0 %517
    %v520 = vadd.f32 %v510, %v518
    %v521 = vtanh.pop %v520
    %523 = vrot.lane.b32.xlu0 %v521, 64
    %v524 = vpop.permute.xlu0 %523
    %v526 = vmul.f32 %v508, %v524
    %v527 = vxor.u32 %v502, 2147483648
    %v528 = vmul.f32 %v527, 1.442695
    %v529 = vpow.pop %v528
    %v530 = vadd.f32 %v529, 1.0
    %v531 = vrcp.pop %v530
    %v532 = vmul.f32 1.0, %v531
    %v533 = vtanh.pop %v502
    %v534 = vmul.f32 %v532, %v342
    %536 = vrot.lane.b32.xlu0 %v533, 64
    %v537 = vpop.permute.xlu0 %536
    %v539 = vmul.f32 %v532, %v537
    %541 = vrot.lane.b32.xlu0 %v539, 32
    %v542 = vpop.permute.xlu0 %541
    %v544 = vadd.f32 %v534, %v542
    %v545 = vtanh.pop %v544
    %547 = vrot.lane.b32.xlu0 %v545, 64
    %v548 = vpop.permute.xlu0 %547
    %v550 = vmul.f32 %v532, %v548
    %552 = vrot.lane.b32.xlu0 %v526, 32
    %v553 = vpop.permute.xlu0 %552
    %s555 = scalar_lea.vmem %s13, %s344
    %556 = vst.msk [vmem:[%s555] sm:$0xff] %vm351, %v553
    %558 = vrot.lane.b32.xlu0 %v550, 32
    %v559 = vpop.permute.xlu0 %558
    %s561 = scalar_lea.vmem %s14, %s345
    %562 = vst.msk [vmem:[%s561] sm:$0xff] %vm351, %v559
  $region58: #{seq2seq_forward.2} parent=0 // loop_footer
    %s338 = sadd.s32 1, %s334
  $region59: #{seq2seq_forward.2} parent=0 // loop_footer_branch
    %333 = sbr.rel target = $region55
  $region60: #{seq2seq_forward.2} parent=0 // loop_exit
    _
  %v563 = vld [vmem:[%s7] sm:$0xff]
  %v564 = vld [vmem:[%s7 + $0x8] sm:$0xff]
  %v565 = vld [vmem:[%s7 + $0x10] sm:$0xff]
  %v566 = vld [vmem:[%s7 + $0x18] sm:$0xff]
  %v567 = vld [vmem:[%s8] sm:$0xff]
  %v568 = vld [vmem:[%s8 + $0x8] sm:$0xff]
  %v569 = vld [vmem:[%s8 + $0x10] sm:$0xff]
  %v570 = vld [vmem:[%s8 + $0x18] sm:$0xff]
  %572 = vrot.lane.b32.xlu0 %v341, 32
  %v573 = vpop.permute.xlu0 %572
  %vm574 = vcmask 261120
  %v575 = vsel %vm574, %v573, 0
  %577 = vmatprep.subr.mxu0 0.0
  %578 = vmatpush1.msra.mxu0 %v567
  %579 = vmatprep.subr.mxu0 0.0
  %580 = vmatpush1.msra.mxu0 %v568
  %581 = vmatprep.subr.mxu0 0.0
  %582 = vmatpush1.msra.mxu0 %v569
  %583 = vmatprep.subr.mxu0 0.0
  %584 = vmatpush1.msra.mxu0 %v570
  %585 = vmatprep.subr.mxu0 0.0
  %586 = vmatpush1.msra.mxu0 0.0
  %587 = vmatprep.subr.mxu0 0.0
  %588 = vmatpush1.msra.mxu0 0.0
  %589 = vmatprep.subr.mxu0 0.0
  %590 = vmatpush1.msra.mxu0 0.0
  %591 = vmatprep.subr.mxu0 0.0
  %592 = vmatpush1.msra.mxu0 0.0
  %593 = vmatprep.subr.mxu0 0.0
  %594 = vmatpush1.msra.mxu0 0.0
  %595 = vmatprep.subr.mxu0 0.0
  %596 = vmatpush1.msra.mxu0 0.0
  %597 = vmatprep.subr.mxu0 0.0
  %598 = vmatpush1.msra.mxu0 0.0
  %599 = vmatprep.subr.mxu0 0.0
  %600 = vmatpush1.msra.mxu0 0.0
  %601 = vmatprep.subr.mxu0 0.0
  %602 = vmatpush1.msra.mxu0 0.0
  %603 = vmatprep.subr.mxu0 0.0
  %604 = vmatpush1.msra.mxu0 0.0
  %605 = vmatprep.subr.mxu0 0.0
  %606 = vmatpush1.msra.mxu0 0.0
  %607 = vmatprep.subr.mxu0 0.0
  %608 = vmatpush1.msra.mxu0 0.0
  %609 = vmatprep.subr.mxu0 0.0
  %610 = vmatpush1.msra.mxu0 0.0
  %611 = vmatprep.subr.mxu0 0.0
  %612 = vmatpush1.msra.mxu0 0.0
  %613 = vmatprep.subr.mxu0 0.0
  %614 = vmatpush1.msra.mxu0 0.0
  %615 = vmatprep.subr.mxu0 0.0
  %616 = vmatpush1.msra.mxu0 0.0
  %617 = vmatprep.subr.mxu0 0.0
  %618 = vmatpush1.msra.mxu0 0.0
  %619 = vmatprep.subr.mxu0 0.0
  %620 = vmatpush1.msra.mxu0 0.0
  %621 = vmatprep.subr.mxu0 0.0
  %622 = vmatpush1.msra.mxu0 0.0
  %623 = vmatprep.subr.mxu0 0.0
  %624 = vmatpush1.msra.mxu0 0.0
  %625 = vmatprep.subr.mxu0 0.0
  %626 = vmatpush1.msra.mxu0 0.0
  %627 = vmatprep.subr.mxu0 0.0
  %628 = vmatpush1.msra.mxu0 0.0
  %629 = vmatprep.subr.mxu0 0.0
  %630 = vmatpush1.msra.mxu0 0.0
  %631 = vmatprep.subr.mxu0 0.0
  %632 = vmatpush1.msra.mxu0 0.0
  %633 = vmatprep.subr.mxu0 0.0
  %634 = vmatpush1.msra.mxu0 0.0
  %635 = vmatprep.subr.mxu0 0.0
  %636 = vmatpush1.msra.mxu0 0.0
  %637 = vmatprep.subr.mxu0 0.0
  %638 = vmatpush1.msra.mxu0 0.0
  %639 = vmatprep.subr.mxu0 0.0
  %640 = vmatpush1.msra.mxu0 0.0
  %641 = vmatprep.mubr.f32.mxu0 0.0
  %642 = vmatmul.mubr.f32.gmra.mrb[0].mxu0 %v575
  %v643 = vpop.f32.mrb[0].mxu0
  %v644 = vadd.f32 0.0, %v643
  %v645 = vpop.f32.mrb[0].mxu0
  %646 = vdwg.mxu0
  %648 = vrot.lane.b32.xlu0 %v339, 32
  %v649 = vpop.permute.xlu0 %648
  %v650 = vsel %vm574, %v649, 0
  %652 = vmatprep.subr.mxu0 0.0
  %653 = vmatpush1.msra.mxu0 %v563
  %654 = vmatprep.subr.mxu0 0.0
  %655 = vmatpush1.msra.mxu0 %v564
  %656 = vmatprep.subr.mxu0 0.0
  %657 = vmatpush1.msra.mxu0 %v565
  %658 = vmatprep.subr.mxu0 0.0
  %659 = vmatpush1.msra.mxu0 %v566
  %660 = vmatprep.subr.mxu0 0.0
  %661 = vmatpush1.msra.mxu0 0.0
  %662 = vmatprep.subr.mxu0 0.0
  %663 = vmatpush1.msra.mxu0 0.0
  %664 = vmatprep.subr.mxu0 0.0
  %665 = vmatpush1.msra.mxu0 0.0
  %666 = vmatprep.subr.mxu0 0.0
  %667 = vmatpush1.msra.mxu0 0.0
  %668 = vmatprep.subr.mxu0 0.0
  %669 = vmatpush1.msra.mxu0 0.0
  %670 = vmatprep.subr.mxu0 0.0
  %671 = vmatpush1.msra.mxu0 0.0
  %672 = vmatprep.subr.mxu0 0.0
  %673 = vmatpush1.msra.mxu0 0.0
  %674 = vmatprep.subr.mxu0 0.0
  %675 = vmatpush1.msra.mxu0 0.0
  %676 = vmatprep.subr.mxu0 0.0
  %677 = vmatpush1.msra.mxu0 0.0
  %678 = vmatprep.subr.mxu0 0.0
  %679 = vmatpush1.msra.mxu0 0.0
  %680 = vmatprep.subr.mxu0 0.0
  %681 = vmatpush1.msra.mxu0 0.0
  %682 = vmatprep.subr.mxu0 0.0
  %683 = vmatpush1.msra.mxu0 0.0
  %684 = vmatprep.subr.mxu0 0.0
  %685 = vmatpush1.msra.mxu0 0.0
  %686 = vmatprep.subr.mxu0 0.0
  %687 = vmatpush1.msra.mxu0 0.0
  %688 = vmatprep.subr.mxu0 0.0
  %689 = vmatpush1.msra.mxu0 0.0
  %690 = vmatprep.subr.mxu0 0.0
  %691 = vmatpush1.msra.mxu0 0.0
  %692 = vmatprep.subr.mxu0 0.0
  %693 = vmatpush1.msra.mxu0 0.0
  %694 = vmatprep.subr.mxu0 0.0
  %695 = vmatpush1.msra.mxu0 0.0
  %696 = vmatprep.subr.mxu0 0.0
  %697 = vmatpush1.msra.mxu0 0.0
  %698 = vmatprep.subr.mxu0 0.0
  %699 = vmatpush1.msra.mxu0 0.0
  %700 = vmatprep.subr.mxu0 0.0
  %701 = vmatpush1.msra.mxu0 0.0
  %702 = vmatprep.subr.mxu0 0.0
  %703 = vmatpush1.msra.mxu0 0.0
  %704 = vmatprep.subr.mxu0 0.0
  %705 = vmatpush1.msra.mxu0 0.0
  %706 = vmatprep.subr.mxu0 0.0
  %707 = vmatpush1.msra.mxu0 0.0
  %708 = vmatprep.subr.mxu0 0.0
  %709 = vmatpush1.msra.mxu0 0.0
  %710 = vmatprep.subr.mxu0 0.0
  %711 = vmatpush1.msra.mxu0 0.0
  %712 = vmatprep.subr.mxu0 0.0
  %713 = vmatpush1.msra.mxu0 0.0
  %714 = vmatprep.subr.mxu0 0.0
  %715 = vmatpush1.msra.mxu0 0.0
  %716 = vmatprep.mubr.f32.mxu0 0.0
  %717 = vmatmul.mubr.f32.gmra.mrb[0].mxu0 %v650
  %v718 = vpop.f32.mrb[0].mxu0
  %v719 = vadd.f32 %v644, %v718
  %v720 = vpop.f32.mrb[0].mxu0
  %721 = vdwg.mxu0
  %v722 = vld [vmem:[%s9] sm:$0x1]
  %v724 = vlaneseq
  %v725 = vshrl.u32 %v724, 7
  %v726 = vsub.s32 0, %v725
  %v727 = vrot.slane %v722, %v726
  %v729 = vadd.f32 %v719, %v727
  %730 = vst.msk [vmem:[%s15] sm:$0xff] %vm574, %v729
  %v731 = vld [vmem:[%s10] sm:$0xff]
  %v732 = vld [vmem:[%s10 + $0x8] sm:$0xff]
  %v733 = vld [vmem:[%s10 + $0x10] sm:$0xff]
  %v734 = vld [vmem:[%s10 + $0x18] sm:$0xff]
  %v735 = vld [vmem:[%s11] sm:$0xff]
  %v736 = vld [vmem:[%s11 + $0x8] sm:$0xff]
  %v737 = vld [vmem:[%s11 + $0x10] sm:$0xff]
  %v738 = vld [vmem:[%s11 + $0x18] sm:$0xff]
  %740 = vrot.lane.b32.xlu0 %v342, 96
  %v741 = vpop.permute.xlu0 %740
  %v742 = vsel %vm574, %v741, 0
  %744 = vmatprep.subr.mxu0 0.0
  %745 = vmatpush1.msra.mxu0 %v735
  %746 = vmatprep.subr.mxu0 0.0
  %747 = vmatpush1.msra.mxu0 %v736
  %748 = vmatprep.subr.mxu0 0.0
  %749 = vmatpush1.msra.mxu0 %v737
  %750 = vmatprep.subr.mxu0 0.0
  %751 = vmatpush1.msra.mxu0 %v738
  %752 = vmatprep.subr.mxu0 0.0
  %753 = vmatpush1.msra.mxu0 0.0
  %754 = vmatprep.subr.mxu0 0.0
  %755 = vmatpush1.msra.mxu0 0.0
  %756 = vmatprep.subr.mxu0 0.0
  %757 = vmatpush1.msra.mxu0 0.0
  %758 = vmatprep.subr.mxu0 0.0
  %759 = vmatpush1.msra.mxu0 0.0
  %760 = vmatprep.subr.mxu0 0.0
  %761 = vmatpush1.msra.mxu0 0.0
  %762 = vmatprep.subr.mxu0 0.0
  %763 = vmatpush1.msra.mxu0 0.0
  %764 = vmatprep.subr.mxu0 0.0
  %765 = vmatpush1.msra.mxu0 0.0
  %766 = vmatprep.subr.mxu0 0.0
  %767 = vmatpush1.msra.mxu0 0.0
  %768 = vmatprep.subr.mxu0 0.0
  %769 = vmatpush1.msra.mxu0 0.0
  %770 = vmatprep.subr.mxu0 0.0
  %771 = vmatpush1.msra.mxu0 0.0
  %772 = vmatprep.subr.mxu0 0.0
  %773 = vmatpush1.msra.mxu0 0.0
  %774 = vmatprep.subr.mxu0 0.0
  %775 = vmatpush1.msra.mxu0 0.0
  %776 = vmatprep.subr.mxu0 0.0
  %777 = vmatpush1.msra.mxu0 0.0
  %778 = vmatprep.subr.mxu0 0.0
  %779 = vmatpush1.msra.mxu0 0.0
  %780 = vmatprep.subr.mxu0 0.0
  %781 = vmatpush1.msra.mxu0 0.0
  %782 = vmatprep.subr.mxu0 0.0
  %783 = vmatpush1.msra.mxu0 0.0
  %784 = vmatprep.subr.mxu0 0.0
  %785 = vmatpush1.msra.mxu0 0.0
  %786 = vmatprep.subr.mxu0 0.0
  %787 = vmatpush1.msra.mxu0 0.0
  %788 = vmatprep.subr.mxu0 0.0
  %789 = vmatpush1.msra.mxu0 0.0
  %790 = vmatprep.subr.mxu0 0.0
  %791 = vmatpush1.msra.mxu0 0.0
  %792 = vmatprep.subr.mxu0 0.0
  %793 = vmatpush1.msra.mxu0 0.0
  %794 = vmatprep.subr.mxu0 0.0
  %795 = vmatpush1.msra.mxu0 0.0
  %796 = vmatprep.subr.mxu0 0.0
  %797 = vmatpush1.msra.mxu0 0.0
  %798 = vmatprep.subr.mxu0 0.0
  %799 = vmatpush1.msra.mxu0 0.0
  %800 = vmatprep.subr.mxu0 0.0
  %801 = vmatpush1.msra.mxu0 0.0
  %802 = vmatprep.subr.mxu0 0.0
  %803 = vmatpush1.msra.mxu0 0.0
  %804 = vmatprep.subr.mxu0 0.0
  %805 = vmatpush1.msra.mxu0 0.0
  %806 = vmatprep.subr.mxu0 0.0
  %807 = vmatpush1.msra.mxu0 0.0
  %808 = vmatprep.mubr.f32.mxu0 0.0
  %809 = vmatmul.mubr.f32.gmra.mrb[0].mxu0 %v742
  %v810 = vpop.f32.mrb[0].mxu0
  %v811 = vadd.f32 0.0, %v810
  %v812 = vpop.f32.mrb[0].mxu0
  %813 = vdwg.mxu0
  %815 = vrot.lane.b32.xlu0 %v340, 96
  %v816 = vpop.permute.xlu0 %815
  %v817 = vsel %vm574, %v816, 0
  %819 = vmatprep.subr.mxu0 0.0
  %820 = vmatpush1.msra.mxu0 %v731
  %821 = vmatprep.subr.mxu0 0.0
  %822 = vmatpush1.msra.mxu0 %v732
  %823 = vmatprep.subr.mxu0 0.0
  %824 = vmatpush1.msra.mxu0 %v733
  %825 = vmatprep.subr.mxu0 0.0
  %826 = vmatpush1.msra.mxu0 %v734
  %827 = vmatprep.subr.mxu0 0.0
  %828 = vmatpush1.msra.mxu0 0.0
  %829 = vmatprep.subr.mxu0 0.0
  %830 = vmatpush1.msra.mxu0 0.0
  %831 = vmatprep.subr.mxu0 0.0
  %832 = vmatpush1.msra.mxu0 0.0
  %833 = vmatprep.subr.mxu0 0.0
  %834 = vmatpush1.msra.mxu0 0.0
  %835 = vmatprep.subr.mxu0 0.0
  %836 = vmatpush1.msra.mxu0 0.0
  %837 = vmatprep.subr.mxu0 0.0
  %838 = vmatpush1.msra.mxu0 0.0
  %839 = vmatprep.subr.mxu0 0.0
  %840 = vmatpush1.msra.mxu0 0.0
  %841 = vmatprep.subr.mxu0 0.0
  %842 = vmatpush1.msra.mxu0 0.0
  %843 = vmatprep.subr.mxu0 0.0
  %844 = vmatpush1.msra.mxu0 0.0
  %845 = vmatprep.subr.mxu0 0.0
  %846 = vmatpush1.msra.mxu0 0.0
  %847 = vmatprep.subr.mxu0 0.0
  %848 = vmatpush1.msra.mxu0 0.0
  %849 = vmatprep.subr.mxu0 0.0
  %850 = vmatpush1.msra.mxu0 0.0
  %851 = vmatprep.subr.mxu0 0.0
  %852 = vmatpush1.msra.mxu0 0.0
  %853 = vmatprep.subr.mxu0 0.0
  %854 = vmatpush1.msra.mxu0 0.0
  %855 = vmatprep.subr.mxu0 0.0
  %856 = vmatpush1.msra.mxu0 0.0
  %857 = vmatprep.subr.mxu0 0.0
  %858 = vmatpush1.msra.mxu0 0.0
  %859 = vmatprep.subr.mxu0 0.0
  %860 = vmatpush1.msra.mxu0 0.0
  %861 = vmatprep.subr.mxu0 0.0
  %862 = vmatpush1.msra.mxu0 0.0
  %863 = vmatprep.subr.mxu0 0.0
  %864 = vmatpush1.msra.mxu0 0.0
  %865 = vmatprep.subr.mxu0 0.0
  %866 = vmatpush1.msra.mxu0 0.0
  %867 = vmatprep.subr.mxu0 0.0
  %868 = vmatpush1.msra.mxu0 0.0
  %869 = vmatprep.subr.mxu0 0.0
  %870 = vmatpush1.msra.mxu0 0.0
  %871 = vmatprep.subr.mxu0 0.0
  %872 = vmatpush1.msra.mxu0 0.0
  %873 = vmatprep.subr.mxu0 0.0
  %874 = vmatpush1.msra.mxu0 0.0
  %875 = vmatprep.subr.mxu0 0.0
  %876 = vmatpush1.msra.mxu0 0.0
  %877 = vmatprep.subr.mxu0 0.0
  %878 = vmatpush1.msra.mxu0 0.0
  %879 = vmatprep.subr.mxu0 0.0
  %880 = vmatpush1.msra.mxu0 0.0
  %881 = vmatprep.subr.mxu0 0.0
  %882 = vmatpush1.msra.mxu0 0.0
  %883 = vmatprep.mubr.f32.mxu0 0.0
  %884 = vmatmul.mubr.f32.gmra.mrb[0].mxu0 %v817
  %v885 = vpop.f32.mrb[0].mxu0
  %v886 = vadd.f32 %v811, %v885
  %v887 = vpop.f32.mrb[0].mxu0
  %888 = vdwg.mxu0
  %v889 = vld [vmem:[%s12] sm:$0x1]
  %v891 = vlaneseq
  %v892 = vshrl.u32 %v891, 7
  %v893 = vsub.s32 0, %v892
  %v894 = vrot.slane %v889, %v893
  %v896 = vadd.f32 %v886, %v894
  %897 = vst.msk [vmem:[%s16] sm:$0xff] %vm574, %v896
  // Predicated region
  $region61: #{seq2seq_forward.2} parent=0 // pred_check
    _
  $region62: #{seq2seq_forward.2} parent=0 // pred_check_branch
    %899 = sbr.rel (0) target = $region64
  $region63: #{seq2seq_forward.2} parent=0 // pred_region
    _
  $region64: #{seq2seq_forward.2} parent=0 // pred_fallthru
    _
  // Predicated region
  $region65: #{seq2seq_forward.2} parent=0 // pred_check
    _
  $region66: #{seq2seq_forward.2} parent=0 // pred_check_branch
    %901 = sbr.rel (0) target = $region68
  $region67: #{seq2seq_forward.2} parent=0 // pred_region
    _
  $region68: #{seq2seq_forward.2} parent=0 // pred_fallthru
    _
  // Predicated region
  $region69: #{seq2seq_forward.2} parent=0 // pred_check
    _
  $region70: #{seq2seq_forward.2} parent=0 // pred_check_branch
    %903 = sbr.rel (0) target = $region72
  $region71: #{seq2seq_forward.2} parent=0 // pred_region
    _
  $region72: #{seq2seq_forward.2} parent=0 // pred_fallthru
    _
  // Predicated region
  $region73: #{seq2seq_forward.2} parent=0 // pred_check
    _
  $region74: #{seq2seq_forward.2} parent=0 // pred_check_branch
    %905 = sbr.rel (0) target = $region76
  $region75: #{seq2seq_forward.2} parent=0 // pred_region
    _
  $region76: #{seq2seq_forward.2} parent=0 // pred_fallthru
    _
  // Predicated region
  $region77: #{seq2seq_forward.2} parent=0 // pred_check
    _
  $region78: #{seq2seq_forward.2} parent=0 // pred_check_branch
    %907 = sbr.rel (0) target = $region80
  $region79: #{seq2seq_forward.2} parent=0 // pred_region
    _
  $region80: #{seq2seq_forward.2} parent=0 // pred_fallthru
    _
  // Predicated region
  $region81: #{seq2seq_forward.2} parent=0 // pred_check
    _
  $region82: #{seq2seq_forward.2} parent=0 // pred_check_branch
    %909 = sbr.rel (0) target = $region84
  $region83: #{seq2seq_forward.2} parent=0 // pred_region
    _
  $region84: #{seq2seq_forward.2} parent=0 // pred_fallthru
    _
  // Predicated region
  $region85: #{seq2seq_forward.2} parent=0 // pred_check
    _
  $region86: #{seq2seq_forward.2} parent=0 // pred_check_branch
    %911 = sbr.rel (0) target = $region88
  $region87: #{seq2seq_forward.2} parent=0 // pred_region
    _
  $region88: #{seq2seq_forward.2} parent=0 // pred_fallthru
    _
  // Predicated region
  $region89: #{seq2seq_forward.2} parent=0 // pred_check
    _
  $region90: #{seq2seq_forward.2} parent=0 // pred_check_branch
    %913 = sbr.rel (0) target = $region92
  $region91: #{seq2seq_forward.2} parent=0 // pred_region
    _
  $region92: #{seq2seq_forward.2} parent=0 // pred_fallthru
    _

</llo_original>
